<compile_context>
chip_gen: v6e
topology: v6e:2x2x1
jax: 0.10.0
libtpu: 0.0.40
codegen_flags: <defaults>
</compile_context>

<pallas_src>
import functools
import math

import jax
import jax.numpy as jnp
from jax.experimental import pallas as pl
from jax.experimental.pallas import tpu as pltpu


_LANE = 128


def _round_up(x, m):
    return ((x + m - 1) // m) * m


def _pick_tile_b(B, requested):
    """Batch-tile size: full block for tiny B, else >=2 grid steps, multiple of 8."""
    if B < 16:
        return B  # single full-array block; block dim == array dim satisfies (8,128) rule
    t = min(requested, _round_up(pl.cdiv(B, 2), 8))
    return max(8, t)


# ----------------------------- Pallas kernel -------------------------------
def _fused_mlp_kernel(*refs, num_layers, precision):
    """refs = (x_ref, w0_ref, b0_ref, ..., w{L-1}_ref, b{L-1}_ref, o_ref).

    Whole projection MLP for one batch tile; every intermediate activation stays
    in registers / VMEM (no per-layer HBM round trip).
    """
    x_ref = refs[0]
    o_ref = refs[-1]
    wb = refs[1:-1]

    h = x_ref[...]
    for i in range(num_layers):
        w_ref = wb[2 * i]        # [in_i, out_i]  (pre-transposed; last one lane-padded)
        b_ref = wb[2 * i + 1]    # [1, out_i]     (f32; last one lane-padded)
        # Cast activations to the weight dtype (bf16 on v6e/v7x) right before the
        # MXU pass; accumulate in f32.
        h = jnp.dot(h.astype(w_ref.dtype), w_ref[...],
                    preferred_element_type=jnp.float32,
                    precision=precision)
        h = h + b_ref[...]                       # bias + ReLU stay in f32 (VPU-friendly, v5e-safe)
        if i != num_layers - 1:
            h = jnp.maximum(h, 0.0)              # ReLU; dropout is identity in eval mode
    o_ref[...] = h.astype(o_ref.dtype)


def fused_projection(x, w_ts, bs, *, num_layers, n_cls, tile_b=512, precision=None):
    """Single fused pallas_call for the whole projection MLP.

    x    : [B, in_dim]
    w_ts : tuple of [in_i, out_i] weights (pre-transposed; last one lane-padded)
    bs   : tuple of [1, out_i] f32 biases (last one lane-padded)
    Returns [B, n_cls].
    """
    B, in_dim = x.shape
    out_pad = int(w_ts[-1].shape[1])     # lane-padded output width (multiple of 128)

    tile_b = _pick_tile_b(B, tile_b)
    grid = (pl.cdiv(B, tile_b),)

    in_specs = [pl.BlockSpec((tile_b, in_dim), lambda i: (i, 0))]
    flat_wb = []
    for w_t, b in zip(w_ts, bs):
        # Weights/biases are grid-invariant: keep them fully resident across the grid.
        in_specs.append(pl.BlockSpec(w_t.shape, lambda i: (0, 0)))
        in_specs.append(pl.BlockSpec(b.shape, lambda i: (0, 0)))
        flat_wb.append(w_t)
        flat_wb.append(b)

    # Advisory cost estimate for XLA's scheduler around the custom call.
    flops = 2 * B * sum(int(w.shape[0]) * int(w.shape[1]) for w in w_ts)
    bytes_accessed = (x.size * x.dtype.itemsize
                      + sum(int(w.size) * w.dtype.itemsize for w in w_ts)
                      + sum(int(b.size) * b.dtype.itemsize for b in bs)
                      + B * out_pad * x.dtype.itemsize)

    # VMEM budget: double-buffered x tile + (double-buffered) resident weights/biases
    # + output tile + intermediate-activation headroom.  Cap at 64 MiB (v7x physical).
    widest = max(int(w.shape[1]) for w in w_ts)
    est = (2 * tile_b * in_dim * x.dtype.itemsize
           + 2 * sum(int(w.size) * w.dtype.itemsize for w in w_ts)
           + 2 * sum(int(b.size) * b.dtype.itemsize for b in bs)
           + 2 * tile_b * out_pad * 4
           + 2 * tile_b * widest * 4)
    vmem_limit = int(min(max(2 * est, 32 * 1024 * 1024), 64 * 1024 * 1024))

    out = pl.pallas_call(
        functools.partial(_fused_mlp_kernel, num_layers=num_layers,
                          precision=precision),
        out_shape=jax.ShapeDtypeStruct((B, out_pad), x.dtype),
        grid=grid,
        in_specs=in_specs,
        out_specs=pl.BlockSpec((tile_b, out_pad), lambda i: (i, 0)),
        compiler_params=pltpu.CompilerParams(
            dimension_semantics=("parallel",),
            vmem_limit_bytes=vmem_limit),
        cost_estimate=pl.CostEstimate(flops=flops, transcendentals=0,
                                      bytes_accessed=bytes_accessed),
    )(x, *flat_wb)

    return out[:, :n_cls]   # drop lane padding inside the jitted wrapper


# --------------------------- Module equivalent ------------------------------
class Projection:
    """JAX/Pallas port of the PyTorch Projection module (eval-mode forward).

    compute_dtype=jnp.bfloat16 is recommended on v6e/v7x for large dims
    (bf16 MXU operands, f32 accumulate); default f32 uses precision=HIGHEST.
    """

    def __init__(self, num_proj_layers, proj_hid_dim, dropout, in_dim, n_cls, key,
                 compute_dtype=jnp.float32, tile_b=512):
        self.num_proj_layers = num_proj_layers
        self.hid_dim = proj_hid_dim
        self.dropout = dropout
        self.n_cls = n_cls
        self.params = []  # list of (W[out,in], b[out]) exactly like nn.Linear

        dims = []
        out_dim = n_cls if num_proj_layers == 1 else proj_hid_dim
        dims.append((in_dim, out_dim))
        for i in range(num_proj_layers - 1):
            out_dim = n_cls if i == num_proj_layers - 2 else proj_hid_dim
            dims.append((proj_hid_dim, out_dim))

        for fan_in, fan_out in dims:
            key, kw, kb = jax.random.split(key, 3)
            bound = 1.0 / math.sqrt(fan_in)  # matches nn.Linear default init range
            W = jax.random.uniform(kw, (fan_out, fan_in), jnp.float32, -bound, bound)
            b = jax.random.uniform(kb, (fan_out,), jnp.float32, -bound, bound)
            self.params.append((W, b))

        # Pre-transpose ONCE -> [in, out]; weights in compute_dtype, biases stay f32
        # (epilogue runs in f32, safe on v5e which has no bf16 VPU).
        w_ts = [jnp.asarray(W.T, dtype=compute_dtype) for W, _ in self.params]
        bs = [b.reshape(1, -1).astype(jnp.float32) for _, b in self.params]

        # Lane-dense output: zero-pad the LAST layer's columns to a multiple of 128
        # so the final store is an unmasked full-lane vst.  Zero columns are inert
        # and sliced off in the wrapper.
        out_pad = _round_up(n_cls, _LANE)
        if out_pad != int(w_ts[-1].shape[1]):
            pad = out_pad - int(w_ts[-1].shape[1])
            w_ts[-1] = jnp.pad(w_ts[-1], ((0, 0), (0, pad)))
            bs[-1] = jnp.pad(bs[-1], ((0, 0), (0, pad)))
        self.w_ts = tuple(w_ts)
        self.bs = tuple(bs)

        precision = (jax.lax.Precision.HIGHEST
                     if jnp.dtype(compute_dtype) == jnp.dtype(jnp.float32) else None)
        self._forward = jax.jit(functools.partial(
            fused_projection, num_layers=num_proj_layers, n_cls=n_cls,
            tile_b=tile_b, precision=precision))

    def __call__(self, x, training=False):
        # TODO(synk): training-mode dropout (PyTorch RNG) has no exact Pallas
        # equivalent; this implements the eval-mode (identity-dropout) forward.
        return self._forward(x, self.w_ts, self.bs)


# -------------------------------- Reference ---------------------------------
def projection_ref(x, params, num_proj_layers):
    h = x
    for i, (W, b) in enumerate(params):
        h = jnp.dot(h, W.T, precision=jax.lax.Precision.HIGHEST) + b
        if i != num_proj_layers - 1:
            h = jnp.maximum(h, 0.0)
    return h


if __name__ == "__main__":
    key = jax.random.PRNGKey(0)
    key, kx, kx2 = jax.random.split(key, 3)

    # args: num_proj_layers=3, proj_hid_dim=32, dropout=0.5 ; in_dim=16, n_cls=4
    B, in_dim, hid_dim, n_cls = 8, 16, 32, 4
    model = Projection(num_proj_layers=3, proj_hid_dim=hid_dim, dropout=0.5,
                       in_dim=in_dim, n_cls=n_cls, key=key)

    # Small batch (single-block path).
    x = jax.random.normal(kx, (B, in_dim), jnp.float32)
    out = jax.block_until_ready(model(x, training=False))
    ref = projection_ref(x, model.params, model.num_proj_layers)
    assert out.shape == (B, n_cls), out.shape
    assert jnp.allclose(out, ref, atol=1e-5, rtol=1e-5), "f32 small-batch mismatch"

    # Larger, non-divisible batch: exercises the cdiv grid, ragged last block,
    # and >=2-step parallel grid (v7x dual-TC sharding).
    B_big = 300
    x_big = jax.random.normal(kx2, (B_big, in_dim), jnp.float32)
    out_big = jax.block_until_ready(model(x_big, training=False))
    ref_big = projection_ref(x_big, model.params, model.num_proj_layers)
    assert out_big.shape == (B_big, n_cls), out_big.shape
    assert jnp.allclose(out_big, ref_big, atol=1e-5, rtol=1e-5), "f32 big-batch mismatch"

    # bf16-operand path (v6e/v7x MXU fast path): same params, loose tolerance
    # because operands are rounded to bf16 (accumulation stays f32).
    model_bf16 = Projection(num_proj_layers=3, proj_hid_dim=hid_dim, dropout=0.5,
                            in_dim=in_dim, n_cls=n_cls, key=jax.random.PRNGKey(0),
                            compute_dtype=jnp.bfloat16)
    out_bf16 = jax.block_until_ready(model_bf16(x_big, training=False))
    ref_bf16 = projection_ref(x_big, model_bf16.params, model_bf16.num_proj_layers)
    assert out_bf16.shape == (B_big, n_cls), out_bf16.shape
    assert jnp.allclose(out_bf16, ref_bf16, atol=5e-2, rtol=5e-2), "bf16 mismatch"

    print("KERNEL_OK")
</pallas_src>

<mosaic_0001>
module attributes {stable_mosaic.version = 11 : i64} {
  func.func @_fused_mlp_kernel(%arg0: i32, %arg1: memref<8x16xf32, #tpu.memory_space<vmem>>, %arg2: memref<16x32xf32, #tpu.memory_space<vmem>>, %arg3: memref<1x32xf32, #tpu.memory_space<vmem>>, %arg4: memref<32x32xf32, #tpu.memory_space<vmem>>, %arg5: memref<1x32xf32, #tpu.memory_space<vmem>>, %arg6: memref<32x128xf32, #tpu.memory_space<vmem>>, %arg7: memref<1x128xf32, #tpu.memory_space<vmem>>, %arg8: memref<8x128xf32, #tpu.memory_space<vmem>>) attributes {dimension_semantics = [#tpu.dimension_semantics<parallel>], iteration_bounds = array<i64: 1>, scalar_prefetch = 0 : i64, scratch_operands = 0 : i64, tpu.core_type = #tpu.core_type<tc>, window_params = [{transform_indices = @transform_0, window_bounds = array<i64: 8, 16>}, {pipeline_mode = #tpu.pipeline_mode<synchronous>, transform_indices = @transform_1, window_bounds = array<i64: 16, 32>}, {pipeline_mode = #tpu.pipeline_mode<synchronous>, transform_indices = @transform_2, window_bounds = array<i64: 1, 32>}, {pipeline_mode = #tpu.pipeline_mode<synchronous>, transform_indices = @transform_3, window_bounds = array<i64: 32, 32>}, {pipeline_mode = #tpu.pipeline_mode<synchronous>, transform_indices = @transform_4, window_bounds = array<i64: 1, 32>}, {pipeline_mode = #tpu.pipeline_mode<synchronous>, transform_indices = @transform_5, window_bounds = array<i64: 32, 128>}, {pipeline_mode = #tpu.pipeline_mode<synchronous>, transform_indices = @transform_6, window_bounds = array<i64: 1, 128>}, {transform_indices = @transform_7, window_bounds = array<i64: 8, 128>}]} {
    %c0 = arith.constant 0 : index
    %c0_0 = arith.constant 0 : index
    %0 = vector.load %arg1[%c0, %c0_0] : memref<8x16xf32, #tpu.memory_space<vmem>>, vector<8x16xf32>
    %c0_1 = arith.constant 0 : index
    %c0_2 = arith.constant 0 : index
    %1 = vector.load %arg2[%c0_1, %c0_2] : memref<16x32xf32, #tpu.memory_space<vmem>>, vector<16x32xf32>
    %cst = arith.constant dense<0.000000e+00> : vector<8x32xf32>
    %2 = tpu.matmul %0, %1, %cst {dimension_numbers = #tpu.dot_dimension_numbers<[1], [0], [0], [1], [0, 0, 1, 1], [], []>, precision = #tpu.contract_precision<fp32>} : vector<8x16xf32>, vector<16x32xf32>, vector<8x32xf32> -> vector<8x32xf32>
    %c0_3 = arith.constant 0 : index
    %c0_4 = arith.constant 0 : index
    %3 = vector.load %arg3[%c0_3, %c0_4] : memref<1x32xf32, #tpu.memory_space<vmem>>, vector<1x32xf32>
    %4 = vector.broadcast %3 : vector<1x32xf32> to vector<8x32xf32>
    %5 = arith.addf %2, %4 : vector<8x32xf32>
    %cst_5 = arith.constant 0.000000e+00 : f32
    %6 = vector.broadcast %cst_5 : f32 to vector<8x32xf32>
    %7 = arith.maximumf %5, %6 : vector<8x32xf32>
    %c0_6 = arith.constant 0 : index
    %c0_7 = arith.constant 0 : index
    %8 = vector.load %arg4[%c0_6, %c0_7] : memref<32x32xf32, #tpu.memory_space<vmem>>, vector<32x32xf32>
    %cst_8 = arith.constant dense<0.000000e+00> : vector<8x32xf32>
    %9 = tpu.matmul %7, %8, %cst_8 {dimension_numbers = #tpu.dot_dimension_numbers<[1], [0], [0], [1], [0, 0, 1, 1], [], []>, precision = #tpu.contract_precision<fp32>} : vector<8x32xf32>, vector<32x32xf32>, vector<8x32xf32> -> vector<8x32xf32>
    %c0_9 = arith.constant 0 : index
    %c0_10 = arith.constant 0 : index
    %10 = vector.load %arg5[%c0_9, %c0_10] : memref<1x32xf32, #tpu.memory_space<vmem>>, vector<1x32xf32>
    %11 = vector.broadcast %10 : vector<1x32xf32> to vector<8x32xf32>
    %12 = arith.addf %9, %11 : vector<8x32xf32>
    %cst_11 = arith.constant 0.000000e+00 : f32
    %13 = vector.broadcast %cst_11 : f32 to vector<8x32xf32>
    %14 = arith.maximumf %12, %13 : vector<8x32xf32>
    %c0_12 = arith.constant 0 : index
    %c0_13 = arith.constant 0 : index
    %15 = vector.load %arg6[%c0_12, %c0_13] : memref<32x128xf32, #tpu.memory_space<vmem>>, vector<32x128xf32>
    %cst_14 = arith.constant dense<0.000000e+00> : vector<8x128xf32>
    %16 = tpu.matmul %14, %15, %cst_14 {dimension_numbers = #tpu.dot_dimension_numbers<[1], [0], [0], [1], [0, 0, 1, 1], [], []>, precision = #tpu.contract_precision<fp32>} : vector<8x32xf32>, vector<32x128xf32>, vector<8x128xf32> -> vector<8x128xf32>
    %c0_15 = arith.constant 0 : index
    %c0_16 = arith.constant 0 : index
    %17 = vector.load %arg7[%c0_15, %c0_16] : memref<1x128xf32, #tpu.memory_space<vmem>>, vector<1x128xf32>
    %18 = vector.broadcast %17 : vector<1x128xf32> to vector<8x128xf32>
    %19 = arith.addf %16, %18 : vector<8x128xf32>
    %c0_17 = arith.constant 0 : index
    %c0_18 = arith.constant 0 : index
    %20 = vector.load %arg8[%c0_17, %c0_18] : memref<8x128xf32, #tpu.memory_space<vmem>>, vector<8x128xf32>
    tpu.vector_store %arg8[%c0_17, %c0_18], %19 {strides = array<i32>} : memref<8x128xf32, #tpu.memory_space<vmem>>, vector<8x128xf32>,
    return
  }
  func.func @transform_0(%arg0: i32) -> (i32, i32) {
    %c0_i32 = arith.constant 0 : i32
    %c0_i32_0 = arith.constant 0 : i32
    return %arg0, %c0_i32 : i32, i32
  }
  func.func @transform_1(%arg0: i32) -> (i32, i32) {
    %c0_i32 = arith.constant 0 : i32
    %c0_i32_0 = arith.constant 0 : i32
    %c0_i32_1 = arith.constant 0 : i32
    return %c0_i32, %c0_i32_0 : i32, i32
  }
  func.func @transform_2(%arg0: i32) -> (i32, i32) {
    %c0_i32 = arith.constant 0 : i32
    %c0_i32_0 = arith.constant 0 : i32
    %c0_i32_1 = arith.constant 0 : i32
    return %c0_i32, %c0_i32_0 : i32, i32
  }
  func.func @transform_3(%arg0: i32) -> (i32, i32) {
    %c0_i32 = arith.constant 0 : i32
    %c0_i32_0 = arith.constant 0 : i32
    %c0_i32_1 = arith.constant 0 : i32
    return %c0_i32, %c0_i32_0 : i32, i32
  }
  func.func @transform_4(%arg0: i32) -> (i32, i32) {
    %c0_i32 = arith.constant 0 : i32
    %c0_i32_0 = arith.constant 0 : i32
    %c0_i32_1 = arith.constant 0 : i32
    return %c0_i32, %c0_i32_0 : i32, i32
  }
  func.func @transform_5(%arg0: i32) -> (i32, i32) {
    %c0_i32 = arith.constant 0 : i32
    %c0_i32_0 = arith.constant 0 : i32
    %c0_i32_1 = arith.constant 0 : i32
    return %c0_i32, %c0_i32_0 : i32, i32
  }
  func.func @transform_6(%arg0: i32) -> (i32, i32) {
    %c0_i32 = arith.constant 0 : i32
    %c0_i32_0 = arith.constant 0 : i32
    %c0_i32_1 = arith.constant 0 : i32
    return %c0_i32, %c0_i32_0 : i32, i32
  }
  func.func @transform_7(%arg0: i32) -> (i32, i32) {
    %c0_i32 = arith.constant 0 : i32
    %c0_i32_0 = arith.constant 0 : i32
    return %arg0, %c0_i32 : i32, i32
  }
}

</mosaic_0001>

<llo_original>
// kernel: fused_projection.1
$region0: #{fused_projection.1}
  #allocation0 [shape = 'u32[]', space=smem, size = 0x4, offset = 0x4, fixed_abs, tag = 'smem constant byte address 0x4 - core index']
  #allocation1 [shape = 'u32[144,128]{1,0:T(1,128)}', space=vmem, size = 0x12000, scoped, tag = 'internal scratch']
  %s0 = inlined_call_operand.hbm [shape: f32[8,16], index: 0, kind: input, shape index: {}]
  %s1 = inlined_call_operand.hbm [shape: f32[16,32], index: 1, kind: input, shape index: {}]
  %s2 = inlined_call_operand.vmem [shape: f32[1,32], index: 2, kind: input, shape index: {}]
  %s3 = inlined_call_operand.hbm [shape: f32[32,32], index: 3, kind: input, shape index: {}]
  %s4 = inlined_call_operand.vmem [shape: f32[1,32], index: 4, kind: input, shape index: {}]
  %s5 = inlined_call_operand.hbm [shape: f32[32,128], index: 5, kind: input, shape index: {}]
  %s6 = inlined_call_operand.vmem [shape: f32[1,128], index: 6, kind: input, shape index: {}]
  %s7 = inlined_call_operand.vmem [shape: f32[8,128], index: 7, kind: output, shape index: {}]
  %s8 = sld [smem:[#allocation0]]
  $region54: #{fused_projection.1} parent=0
    _
  %s10 = ssub.s32 1, %s8
  %s11 = scalar_select 0, %s10, %s8
  $region1: #{fused_projection.1} parent=0
    #allocation2 [shape = 'u8[4096]{0}', space=vmem, size = 0x1000, scoped, tag = 'input window, operand 0, single buffered']
    #allocation3 [shape = 's32[1]{0}', space=sflag, size = 0x4, scoped, tag = 'scoped memory for fused_projection.1']
    #allocation4 [shape = 'u8[8192]{0}', space=vmem, size = 0x2000, scoped, tag = 'input window, operand 1, single buffered']
    #allocation5 [shape = 's32[1]{0}', space=sflag, size = 0x4, scoped, tag = 'scoped memory for fused_projection.1']
    #allocation6 [shape = 'u8[16384]{0}', space=vmem, size = 0x4000, scoped, tag = 'input window, operand 3, single buffered']
    #allocation7 [shape = 'u8[16384]{0}', space=vmem, size = 0x4000, scoped, tag = 'input window, operand 5, single buffered']
    #allocation8 [shape = 's32[1]{0}', space=sflag, size = 0x4, scoped, tag = 'scoped memory for fused_projection.1']
    %12 = vsyncpa [#allocation3], 0
    %13 = vsyncpa [#allocation5], 0
    %14 = vsyncpa [#allocation8], 0
    // Predicated region
    $region2: #{fused_projection.1} parent=1 // pred_check
      _
    $region3: #{fused_projection.1} parent=1 // pred_check_branch
      %16 = sbr.rel (0) target = $region5
    $region4: #{fused_projection.1} parent=1 // pred_region
      %s18 = ssub.s32 128, 128
      %19 = vsyncadd [#allocation3], %s18
      %s21 = sshll.u32 [#allocation2], 4
      %s22 = int_to_ptr.vmem [resolvable:$true] %s21
      %24 = dma.hbm_to_vmem [thread:$0]  %s0, 128, %s22, [#allocation3]
    $region5: #{fused_projection.1} parent=1 // pred_fallthru
      _
    // Predicated region
    $region6: #{fused_projection.1} parent=1 // pred_check
      _
    $region7: #{fused_projection.1} parent=1 // pred_check_branch
      %26 = sbr.rel (0) target = $region9
    $region8: #{fused_projection.1} parent=1 // pred_region
      %s28 = ssub.s32 256, 256
      %29 = vsyncadd [#allocation5], %s28
      %s30 = sshll.u32 [#allocation4], 4
      %s31 = int_to_ptr.vmem [resolvable:$true] %s30
      %36 = dma.hbm_to_vmem [thread:$0]  %s1, 256, %s31, [#allocation5], 128, 128, 8
    $region9: #{fused_projection.1} parent=1 // pred_fallthru
      _
    // Predicated region
    $region10: #{fused_projection.1} parent=1 // pred_check
      _
    $region11: #{fused_projection.1} parent=1 // pred_check_branch
      %38 = sbr.rel (0) target = $region13
    $region12: #{fused_projection.1} parent=1 // pred_region
      _
    $region13: #{fused_projection.1} parent=1 // pred_fallthru
      _
    // Predicated region
    $region14: #{fused_projection.1} parent=1 // pred_check
      _
    $region15: #{fused_projection.1} parent=1 // pred_check_branch
      %40 = sbr.rel (0) target = $region17
    $region16: #{fused_projection.1} parent=1 // pred_region
      %s42 = ssub.s32 512, 512
      %43 = vsyncadd [#allocation5], %s42
      %s44 = sshll.u32 [#allocation6], 4
      %s45 = int_to_ptr.vmem [resolvable:$true] %s44
      %50 = dma.hbm_to_vmem [thread:$0]  %s3, 512, %s45, [#allocation5], 128, 128, 8
    $region17: #{fused_projection.1} parent=1 // pred_fallthru
      _
    // Predicated region
    $region18: #{fused_projection.1} parent=1 // pred_check
      _
    $region19: #{fused_projection.1} parent=1 // pred_check_branch
      %52 = sbr.rel (0) target = $region21
    $region20: #{fused_projection.1} parent=1 // pred_region
      _
    $region21: #{fused_projection.1} parent=1 // pred_fallthru
      _
    // Predicated region
    $region22: #{fused_projection.1} parent=1 // pred_check
      _
    $region23: #{fused_projection.1} parent=1 // pred_check_branch
      %54 = sbr.rel (0) target = $region25
    $region24: #{fused_projection.1} parent=1 // pred_region
      %s56 = ssub.s32 512, 512
      %57 = vsyncadd [#allocation8], %s56
      %s58 = sshll.u32 [#allocation7], 4
      %s59 = int_to_ptr.vmem [resolvable:$true] %s58
      %64 = dma.hbm_to_vmem [thread:$0]  %s5, 512, %s59, [#allocation8], 128, 128, 8
    $region25: #{fused_projection.1} parent=1 // pred_fallthru
      _
    // Predicated region
    $region26: #{fused_projection.1} parent=1 // pred_check
      _
    $region27: #{fused_projection.1} parent=1 // pred_check_branch
      %66 = sbr.rel (0) target = $region29
    $region28: #{fused_projection.1} parent=1 // pred_region
      _
    $region29: #{fused_projection.1} parent=1 // pred_fallthru
      _
    // Predicated region
    $region30: #{fused_projection.1} parent=1 // pred_check
      _
    $region31: #{fused_projection.1} parent=1 // pred_check_branch
      %68 = sbr.rel (0) target = $region33
    $region32: #{fused_projection.1} parent=1 // pred_region
      %69 = dma.done [#allocation3], 128
    $region33: #{fused_projection.1} parent=1 // pred_fallthru
      _
    // Predicated region
    $region34: #{fused_projection.1} parent=1 // pred_check
      _
    $region35: #{fused_projection.1} parent=1 // pred_check_branch
      %71 = sbr.rel (0) target = $region37
    $region36: #{fused_projection.1} parent=1 // pred_region
      %72 = dma.done [#allocation5], 256
    $region37: #{fused_projection.1} parent=1 // pred_fallthru
      _
    // Predicated region
    $region38: #{fused_projection.1} parent=1 // pred_check
      _
    $region39: #{fused_projection.1} parent=1 // pred_check_branch
      %74 = sbr.rel (0) target = $region41
    $region40: #{fused_projection.1} parent=1 // pred_region
      %75 = dma.done [#allocation5], 512
    $region41: #{fused_projection.1} parent=1 // pred_fallthru
      _
    // Predicated region
    $region42: #{fused_projection.1} parent=1 // pred_check
      _
    $region43: #{fused_projection.1} parent=1 // pred_check_branch
      %77 = sbr.rel (0) target = $region45
    $region44: #{fused_projection.1} parent=1 // pred_region
      %78 = dma.done [#allocation8], 512
    $region45: #{fused_projection.1} parent=1 // pred_fallthru
      _
    %v79 = vld [vmem:[#allocation2] sm:$0xff]
    %v80 = vld [vmem:[#allocation4] sm:$0xff]
    %v81 = vld [vmem:[#allocation4 + $0x8] sm:$0xff]
    %v82 = vld [vmem:[%s2] sm:$0x1]
    %v84 = vlaneseq
    %v85 = vshrl.u32 %v84, 7
    %v86 = vsub.s32 0, %v85
    %v87 = vrot.slane %v82, %v86
    %vm89 = vcmask 130048
    %v91 = vsel %vm89, %v79, 0
    %93 = vmatprep.subr.mxu0 0.0
    %94 = vmatpush1.msra.mxu0 0.0
    %95 = vmatprep.subr.mxu0 0.0
    %96 = vmatpush1.msra.mxu0 0.0
    %97 = vmatprep.subr.mxu0 0.0
    %98 = vmatpush1.msra.mxu0 0.0
    %99 = vmatprep.subr.mxu0 0.0
    %100 = vmatpush1.msra.mxu0 0.0
    %101 = vmatprep.subr.mxu0 0.0
    %102 = vmatpush1.msra.mxu0 0.0
    %103 = vmatprep.subr.mxu0 0.0
    %104 = vmatpush1.msra.mxu0 0.0
    %105 = vmatprep.subr.mxu0 0.0
    %106 = vmatpush1.msra.mxu0 0.0
    %107 = vmatprep.subr.mxu0 0.0
    %108 = vmatpush1.msra.mxu0 0.0
    %109 = vmatprep.subr.mxu0 0.0
    %110 = vmatpush1.msra.mxu0 0.0
    %111 = vmatprep.subr.mxu0 0.0
    %112 = vmatpush1.msra.mxu0 0.0
    %113 = vmatprep.subr.mxu0 0.0
    %114 = vmatpush1.msra.mxu0 0.0
    %115 = vmatprep.subr.mxu0 0.0
    %116 = vmatpush1.msra.mxu0 0.0
    %117 = vmatprep.subr.mxu0 0.0
    %118 = vmatpush1.msra.mxu0 0.0
    %119 = vmatprep.subr.mxu0 0.0
    %120 = vmatpush1.msra.mxu0 0.0
    %121 = vmatprep.subr.mxu0 0.0
    %v122 = vand.u32 %v81, 4294901760
    %123 = vmatpush1.msra.mxu0 %v122
    %124 = vmatprep.subr.mxu0 0.0
    %v125 = vand.u32 %v80, 4294901760
    %126 = vmatpush1.msra.mxu0 %v125
    %127 = vmatprep.subr.mxu0 0.0
    %128 = vmatpush2.msra.mxu0 0.0
    %129 = vmatprep.subr.mxu0 0.0
    %130 = vmatpush2.msra.mxu0 0.0
    %131 = vmatprep.subr.mxu0 0.0
    %132 = vmatpush2.msra.mxu0 0.0
    %133 = vmatprep.subr.mxu0 0.0
    %134 = vmatpush2.msra.mxu0 0.0
    %135 = vmatprep.subr.mxu0 0.0
    %136 = vmatpush2.msra.mxu0 0.0
    %137 = vmatprep.subr.mxu0 0.0
    %138 = vmatpush2.msra.mxu0 0.0
    %139 = vmatprep.subr.mxu0 0.0
    %140 = vmatpush2.msra.mxu0 0.0
    %141 = vmatprep.subr.mxu0 0.0
    %142 = vmatpush2.msra.mxu0 0.0
    %143 = vmatprep.subr.mxu0 0.0
    %144 = vmatpush2.msra.mxu0 0.0
    %145 = vmatprep.subr.mxu0 0.0
    %146 = vmatpush2.msra.mxu0 0.0
    %147 = vmatprep.subr.mxu0 0.0
    %148 = vmatpush2.msra.mxu0 0.0
    %149 = vmatprep.subr.mxu0 0.0
    %150 = vmatpush2.msra.mxu0 0.0
    %151 = vmatprep.subr.mxu0 0.0
    %152 = vmatpush2.msra.mxu0 0.0
    %153 = vmatprep.subr.mxu0 0.0
    %154 = vmatpush2.msra.mxu0 0.0
    %155 = vmatprep.subr.mxu0 0.0
    %156 = vmatpush2.msra.mxu0 0.0
    %157 = vmatprep.subr.mxu0 0.0
    %158 = vmatpush2.msra.mxu0 0.0
    %159 = vmatprep.mubr.f32.mxu0 0.0
    %v160 = vand.u32 %v91, 4294901760
    %v161 = vsub.f32 %v91, %v160
    %v162 = vand.u32 %v161, 4294901760
    %v163 = vsub.f32 %v161, %v162
    %v164 = vand.u32 %v163, 4294901760
    %165 = vmatmul.mubr.f32.gmra.mxu0 %v164
    %v166 = vpop.f32.mrf.mxu0
    %v167 = vadd.f32 %v87, %v166
    %v168 = vpop.f32.mrf.mxu0
    %169 = vdwg.mxu0
    %170 = vmatprep.subr.mxu0 0.0
    %171 = vmatpush1.msra.mxu0 0.0
    %172 = vmatprep.subr.mxu0 0.0
    %173 = vmatpush1.msra.mxu0 0.0
    %174 = vmatprep.subr.mxu0 0.0
    %175 = vmatpush1.msra.mxu0 0.0
    %176 = vmatprep.subr.mxu0 0.0
    %177 = vmatpush1.msra.mxu0 0.0
    %178 = vmatprep.subr.mxu0 0.0
    %179 = vmatpush1.msra.mxu0 0.0
    %180 = vmatprep.subr.mxu0 0.0
    %181 = vmatpush1.msra.mxu0 0.0
    %182 = vmatprep.subr.mxu0 0.0
    %183 = vmatpush1.msra.mxu0 0.0
    %184 = vmatprep.subr.mxu0 0.0
    %185 = vmatpush1.msra.mxu0 0.0
    %186 = vmatprep.subr.mxu0 0.0
    %187 = vmatpush1.msra.mxu0 0.0
    %188 = vmatprep.subr.mxu0 0.0
    %189 = vmatpush1.msra.mxu0 0.0
    %190 = vmatprep.subr.mxu0 0.0
    %191 = vmatpush1.msra.mxu0 0.0
    %192 = vmatprep.subr.mxu0 0.0
    %193 = vmatpush1.msra.mxu0 0.0
    %194 = vmatprep.subr.mxu0 0.0
    %195 = vmatpush1.msra.mxu0 0.0
    %196 = vmatprep.subr.mxu0 0.0
    %197 = vmatpush1.msra.mxu0 0.0
    %198 = vmatprep.subr.mxu0 0.0
    %v199 = vand.u32 %v81, 4294901760
    %v200 = vsub.f32 %v81, %v199
    %v201 = vand.u32 %v200, 4294901760
    %v202 = vsub.f32 %v200, %v201
    %v203 = vand.u32 %v202, 4294901760
    %204 = vmatpush1.msra.mxu0 %v203
    %205 = vmatprep.subr.mxu0 0.0
    %v206 = vand.u32 %v80, 4294901760
    %v207 = vsub.f32 %v80, %v206
    %v208 = vand.u32 %v207, 4294901760
    %v209 = vsub.f32 %v207, %v208
    %v210 = vand.u32 %v209, 4294901760
    %211 = vmatpush1.msra.mxu0 %v210
    %212 = vmatprep.subr.mxu0 0.0
    %213 = vmatpush2.msra.mxu0 0.0
    %214 = vmatprep.subr.mxu0 0.0
    %215 = vmatpush2.msra.mxu0 0.0
    %216 = vmatprep.subr.mxu0 0.0
    %217 = vmatpush2.msra.mxu0 0.0
    %218 = vmatprep.subr.mxu0 0.0
    %219 = vmatpush2.msra.mxu0 0.0
    %220 = vmatprep.subr.mxu0 0.0
    %221 = vmatpush2.msra.mxu0 0.0
    %222 = vmatprep.subr.mxu0 0.0
    %223 = vmatpush2.msra.mxu0 0.0
    %224 = vmatprep.subr.mxu0 0.0
    %225 = vmatpush2.msra.mxu0 0.0
    %226 = vmatprep.subr.mxu0 0.0
    %227 = vmatpush2.msra.mxu0 0.0
    %228 = vmatprep.subr.mxu0 0.0
    %229 = vmatpush2.msra.mxu0 0.0
    %230 = vmatprep.subr.mxu0 0.0
    %231 = vmatpush2.msra.mxu0 0.0
    %232 = vmatprep.subr.mxu0 0.0
    %233 = vmatpush2.msra.mxu0 0.0
    %234 = vmatprep.subr.mxu0 0.0
    %235 = vmatpush2.msra.mxu0 0.0
    %236 = vmatprep.subr.mxu0 0.0
    %237 = vmatpush2.msra.mxu0 0.0
    %238 = vmatprep.subr.mxu0 0.0
    %239 = vmatpush2.msra.mxu0 0.0
    %240 = vmatprep.subr.mxu0 0.0
    %241 = vmatpush2.msra.mxu0 0.0
    %242 = vmatprep.subr.mxu0 0.0
    %243 = vmatpush2.msra.mxu0 0.0
    %244 = vmatprep.mubr.f32.mxu0 0.0
    %v245 = vand.u32 %v91, 4294901760
    %246 = vmatmul.mubr.f32.gmra.mxu0 %v245
    %v247 = vpop.f32.mrf.mxu0
    %v248 = vadd.f32 %v167, %v247
    %v249 = vpop.f32.mrf.mxu0
    %250 = vdwg.mxu0
    %251 = vmatprep.subr.mxu0 0.0
    %252 = vmatpush1.msra.mxu0 0.0
    %253 = vmatprep.subr.mxu0 0.0
    %254 = vmatpush1.msra.mxu0 0.0
    %255 = vmatprep.subr.mxu0 0.0
    %256 = vmatpush1.msra.mxu0 0.0
    %257 = vmatprep.subr.mxu0 0.0
    %258 = vmatpush1.msra.mxu0 0.0
    %259 = vmatprep.subr.mxu0 0.0
    %260 = vmatpush1.msra.mxu0 0.0
    %261 = vmatprep.subr.mxu0 0.0
    %262 = vmatpush1.msra.mxu0 0.0
    %263 = vmatprep.subr.mxu0 0.0
    %264 = vmatpush1.msra.mxu0 0.0
    %265 = vmatprep.subr.mxu0 0.0
    %266 = vmatpush1.msra.mxu0 0.0
    %267 = vmatprep.subr.mxu0 0.0
    %268 = vmatpush1.msra.mxu0 0.0
    %269 = vmatprep.subr.mxu0 0.0
    %270 = vmatpush1.msra.mxu0 0.0
    %271 = vmatprep.subr.mxu0 0.0
    %272 = vmatpush1.msra.mxu0 0.0
    %273 = vmatprep.subr.mxu0 0.0
    %274 = vmatpush1.msra.mxu0 0.0
    %275 = vmatprep.subr.mxu0 0.0
    %276 = vmatpush1.msra.mxu0 0.0
    %277 = vmatprep.subr.mxu0 0.0
    %278 = vmatpush1.msra.mxu0 0.0
    %279 = vmatprep.subr.mxu0 0.0
    %v280 = vand.u32 %v81, 4294901760
    %v281 = vsub.f32 %v81, %v280
    %282 = vmatpush1.msra.mxu0 %v281
    %283 = vmatprep.subr.mxu0 0.0
    %v284 = vand.u32 %v80, 4294901760
    %v285 = vsub.f32 %v80, %v284
    %286 = vmatpush1.msra.mxu0 %v285
    %287 = vmatprep.subr.mxu0 0.0
    %288 = vmatpush2.msra.mxu0 0.0
    %289 = vmatprep.subr.mxu0 0.0
    %290 = vmatpush2.msra.mxu0 0.0
    %291 = vmatprep.subr.mxu0 0.0
    %292 = vmatpush2.msra.mxu0 0.0
    %293 = vmatprep.subr.mxu0 0.0
    %294 = vmatpush2.msra.mxu0 0.0
    %295 = vmatprep.subr.mxu0 0.0
    %296 = vmatpush2.msra.mxu0 0.0
    %297 = vmatprep.subr.mxu0 0.0
    %298 = vmatpush2.msra.mxu0 0.0
    %299 = vmatprep.subr.mxu0 0.0
    %300 = vmatpush2.msra.mxu0 0.0
    %301 = vmatprep.subr.mxu0 0.0
    %302 = vmatpush2.msra.mxu0 0.0
    %303 = vmatprep.subr.mxu0 0.0
    %304 = vmatpush2.msra.mxu0 0.0
    %305 = vmatprep.subr.mxu0 0.0
    %306 = vmatpush2.msra.mxu0 0.0
    %307 = vmatprep.subr.mxu0 0.0
    %308 = vmatpush2.msra.mxu0 0.0
    %309 = vmatprep.subr.mxu0 0.0
    %310 = vmatpush2.msra.mxu0 0.0
    %311 = vmatprep.subr.mxu0 0.0
    %312 = vmatpush2.msra.mxu0 0.0
    %313 = vmatprep.subr.mxu0 0.0
    %314 = vmatpush2.msra.mxu0 0.0
    %315 = vmatprep.subr.mxu0 0.0
    %316 = vmatpush2.msra.mxu0 0.0
    %317 = vmatprep.subr.mxu0 0.0
    %318 = vmatpush2.msra.mxu0 0.0
    %319 = vmatprep.mubr.f32.mxu0 0.0
    %v320 = vand.u32 %v91, 4294901760
    %v321 = vsub.f32 %v91, %v320
    %322 = vmatmul.mubr.f32.gmra.mxu0 %v321
    %v323 = vpop.f32.mrf.mxu0
    %v324 = vadd.f32 %v248, %v323
    %v325 = vpop.f32.mrf.mxu0
    %326 = vdwg.mxu0
    %327 = vmatprep.subr.mxu0 0.0
    %328 = vmatpush1.msra.mxu0 0.0
    %329 = vmatprep.subr.mxu0 0.0
    %330 = vmatpush1.msra.mxu0 0.0
    %331 = vmatprep.subr.mxu0 0.0
    %332 = vmatpush1.msra.mxu0 0.0
    %333 = vmatprep.subr.mxu0 0.0
    %334 = vmatpush1.msra.mxu0 0.0
    %335 = vmatprep.subr.mxu0 0.0
    %336 = vmatpush1.msra.mxu0 0.0
    %337 = vmatprep.subr.mxu0 0.0
    %338 = vmatpush1.msra.mxu0 0.0
    %339 = vmatprep.subr.mxu0 0.0
    %340 = vmatpush1.msra.mxu0 0.0
    %341 = vmatprep.subr.mxu0 0.0
    %342 = vmatpush1.msra.mxu0 0.0
    %343 = vmatprep.subr.mxu0 0.0
    %344 = vmatpush1.msra.mxu0 0.0
    %345 = vmatprep.subr.mxu0 0.0
    %346 = vmatpush1.msra.mxu0 0.0
    %347 = vmatprep.subr.mxu0 0.0
    %348 = vmatpush1.msra.mxu0 0.0
    %349 = vmatprep.subr.mxu0 0.0
    %350 = vmatpush1.msra.mxu0 0.0
    %351 = vmatprep.subr.mxu0 0.0
    %352 = vmatpush1.msra.mxu0 0.0
    %353 = vmatprep.subr.mxu0 0.0
    %354 = vmatpush1.msra.mxu0 0.0
    %355 = vmatprep.subr.mxu0 0.0
    %v356 = vand.u32 %v81, 4294901760
    %357 = vmatpush1.msra.mxu0 %v356
    %358 = vmatprep.subr.mxu0 0.0
    %v359 = vand.u32 %v80, 4294901760
    %360 = vmatpush1.msra.mxu0 %v359
    %361 = vmatprep.subr.mxu0 0.0
    %362 = vmatpush2.msra.mxu0 0.0
    %363 = vmatprep.subr.mxu0 0.0
    %364 = vmatpush2.msra.mxu0 0.0
    %365 = vmatprep.subr.mxu0 0.0
    %366 = vmatpush2.msra.mxu0 0.0
    %367 = vmatprep.subr.mxu0 0.0
    %368 = vmatpush2.msra.mxu0 0.0
    %369 = vmatprep.subr.mxu0 0.0
    %370 = vmatpush2.msra.mxu0 0.0
    %371 = vmatprep.subr.mxu0 0.0
    %372 = vmatpush2.msra.mxu0 0.0
    %373 = vmatprep.subr.mxu0 0.0
    %374 = vmatpush2.msra.mxu0 0.0
    %375 = vmatprep.subr.mxu0 0.0
    %376 = vmatpush2.msra.mxu0 0.0
    %377 = vmatprep.subr.mxu0 0.0
    %378 = vmatpush2.msra.mxu0 0.0
    %379 = vmatprep.subr.mxu0 0.0
    %380 = vmatpush2.msra.mxu0 0.0
    %381 = vmatprep.subr.mxu0 0.0
    %382 = vmatpush2.msra.mxu0 0.0
    %383 = vmatprep.subr.mxu0 0.0
    %384 = vmatpush2.msra.mxu0 0.0
    %385 = vmatprep.subr.mxu0 0.0
    %386 = vmatpush2.msra.mxu0 0.0
    %387 = vmatprep.subr.mxu0 0.0
    %388 = vmatpush2.msra.mxu0 0.0
    %389 = vmatprep.subr.mxu0 0.0
    %390 = vmatpush2.msra.mxu0 0.0
    %391 = vmatprep.subr.mxu0 0.0
    %392 = vmatpush2.msra.mxu0 0.0
    %393 = vmatprep.mubr.f32.mxu0 0.0
    %v394 = vand.u32 %v91, 4294901760
    %v395 = vsub.f32 %v91, %v394
    %v396 = vand.u32 %v395, 4294901760
    %397 = vmatmul.mubr.f32.gmra.mxu0 %v396
    %v398 = vpop.f32.mrf.mxu0
    %v399 = vadd.f32 %v324, %v398
    %v400 = vpop.f32.mrf.mxu0
    %401 = vdwg.mxu0
    %402 = vmatprep.subr.mxu0 0.0
    %403 = vmatpush1.msra.mxu0 0.0
    %404 = vmatprep.subr.mxu0 0.0
    %405 = vmatpush1.msra.mxu0 0.0
    %406 = vmatprep.subr.mxu0 0.0
    %407 = vmatpush1.msra.mxu0 0.0
    %408 = vmatprep.subr.mxu0 0.0
    %409 = vmatpush1.msra.mxu0 0.0
    %410 = vmatprep.subr.mxu0 0.0
    %411 = vmatpush1.msra.mxu0 0.0
    %412 = vmatprep.subr.mxu0 0.0
    %413 = vmatpush1.msra.mxu0 0.0
    %414 = vmatprep.subr.mxu0 0.0
    %415 = vmatpush1.msra.mxu0 0.0
    %416 = vmatprep.subr.mxu0 0.0
    %417 = vmatpush1.msra.mxu0 0.0
    %418 = vmatprep.subr.mxu0 0.0
    %419 = vmatpush1.msra.mxu0 0.0
    %420 = vmatprep.subr.mxu0 0.0
    %421 = vmatpush1.msra.mxu0 0.0
    %422 = vmatprep.subr.mxu0 0.0
    %423 = vmatpush1.msra.mxu0 0.0
    %424 = vmatprep.subr.mxu0 0.0
    %425 = vmatpush1.msra.mxu0 0.0
    %426 = vmatprep.subr.mxu0 0.0
    %427 = vmatpush1.msra.mxu0 0.0
    %428 = vmatprep.subr.mxu0 0.0
    %429 = vmatpush1.msra.mxu0 0.0
    %430 = vmatprep.subr.mxu0 0.0
    %v431 = vand.u32 %v81, 4294901760
    %v432 = vsub.f32 %v81, %v431
    %v433 = vand.u32 %v432, 4294901760
    %434 = vmatpush1.msra.mxu0 %v433
    %435 = vmatprep.subr.mxu0 0.0
    %v436 = vand.u32 %v80, 4294901760
    %v437 = vsub.f32 %v80, %v436
    %v438 = vand.u32 %v437, 4294901760
    %439 = vmatpush1.msra.mxu0 %v438
    %440 = vmatprep.subr.mxu0 0.0
    %441 = vmatpush2.msra.mxu0 0.0
    %442 = vmatprep.subr.mxu0 0.0
    %443 = vmatpush2.msra.mxu0 0.0
    %444 = vmatprep.subr.mxu0 0.0
    %445 = vmatpush2.msra.mxu0 0.0
    %446 = vmatprep.subr.mxu0 0.0
    %447 = vmatpush2.msra.mxu0 0.0
    %448 = vmatprep.subr.mxu0 0.0
    %449 = vmatpush2.msra.mxu0 0.0
    %450 = vmatprep.subr.mxu0 0.0
    %451 = vmatpush2.msra.mxu0 0.0
    %452 = vmatprep.subr.mxu0 0.0
    %453 = vmatpush2.msra.mxu0 0.0
    %454 = vmatprep.subr.mxu0 0.0
    %455 = vmatpush2.msra.mxu0 0.0
    %456 = vmatprep.subr.mxu0 0.0
    %457 = vmatpush2.msra.mxu0 0.0
    %458 = vmatprep.subr.mxu0 0.0
    %459 = vmatpush2.msra.mxu0 0.0
    %460 = vmatprep.subr.mxu0 0.0
    %461 = vmatpush2.msra.mxu0 0.0
    %462 = vmatprep.subr.mxu0 0.0
    %463 = vmatpush2.msra.mxu0 0.0
    %464 = vmatprep.subr.mxu0 0.0
    %465 = vmatpush2.msra.mxu0 0.0
    %466 = vmatprep.subr.mxu0 0.0
    %467 = vmatpush2.msra.mxu0 0.0
    %468 = vmatprep.subr.mxu0 0.0
    %469 = vmatpush2.msra.mxu0 0.0
    %470 = vmatprep.subr.mxu0 0.0
    %471 = vmatpush2.msra.mxu0 0.0
    %472 = vmatprep.mubr.f32.mxu0 0.0
    %v473 = vand.u32 %v91, 4294901760
    %474 = vmatmul.mubr.f32.gmra.mxu0 %v473
    %v475 = vpop.f32.mrf.mxu0
    %v476 = vadd.f32 %v399, %v475
    %v477 = vpop.f32.mrf.mxu0
    %478 = vdwg.mxu0
    %479 = vmatprep.subr.mxu0 0.0
    %480 = vmatpush1.msra.mxu0 0.0
    %481 = vmatprep.subr.mxu0 0.0
    %482 = vmatpush1.msra.mxu0 0.0
    %483 = vmatprep.subr.mxu0 0.0
    %484 = vmatpush1.msra.mxu0 0.0
    %485 = vmatprep.subr.mxu0 0.0
    %486 = vmatpush1.msra.mxu0 0.0
    %487 = vmatprep.subr.mxu0 0.0
    %488 = vmatpush1.msra.mxu0 0.0
    %489 = vmatprep.subr.mxu0 0.0
    %490 = vmatpush1.msra.mxu0 0.0
    %491 = vmatprep.subr.mxu0 0.0
    %492 = vmatpush1.msra.mxu0 0.0
    %493 = vmatprep.subr.mxu0 0.0
    %494 = vmatpush1.msra.mxu0 0.0
    %495 = vmatprep.subr.mxu0 0.0
    %496 = vmatpush1.msra.mxu0 0.0
    %497 = vmatprep.subr.mxu0 0.0
    %498 = vmatpush1.msra.mxu0 0.0
    %499 = vmatprep.subr.mxu0 0.0
    %500 = vmatpush1.msra.mxu0 0.0
    %501 = vmatprep.subr.mxu0 0.0
    %502 = vmatpush1.msra.mxu0 0.0
    %503 = vmatprep.subr.mxu0 0.0
    %504 = vmatpush1.msra.mxu0 0.0
    %505 = vmatprep.subr.mxu0 0.0
    %506 = vmatpush1.msra.mxu0 0.0
    %507 = vmatprep.subr.mxu0 0.0
    %v508 = vand.u32 %v81, 4294901760
    %509 = vmatpush1.msra.mxu0 %v508
    %510 = vmatprep.subr.mxu0 0.0
    %v511 = vand.u32 %v80, 4294901760
    %512 = vmatpush1.msra.mxu0 %v511
    %513 = vmatprep.subr.mxu0 0.0
    %514 = vmatpush2.msra.mxu0 0.0
    %515 = vmatprep.subr.mxu0 0.0
    %516 = vmatpush2.msra.mxu0 0.0
    %517 = vmatprep.subr.mxu0 0.0
    %518 = vmatpush2.msra.mxu0 0.0
    %519 = vmatprep.subr.mxu0 0.0
    %520 = vmatpush2.msra.mxu0 0.0
    %521 = vmatprep.subr.mxu0 0.0
    %522 = vmatpush2.msra.mxu0 0.0
    %523 = vmatprep.subr.mxu0 0.0
    %524 = vmatpush2.msra.mxu0 0.0
    %525 = vmatprep.subr.mxu0 0.0
    %526 = vmatpush2.msra.mxu0 0.0
    %527 = vmatprep.subr.mxu0 0.0
    %528 = vmatpush2.msra.mxu0 0.0
    %529 = vmatprep.subr.mxu0 0.0
    %530 = vmatpush2.msra.mxu0 0.0
    %531 = vmatprep.subr.mxu0 0.0
    %532 = vmatpush2.msra.mxu0 0.0
    %533 = vmatprep.subr.mxu0 0.0
    %534 = vmatpush2.msra.mxu0 0.0
    %535 = vmatprep.subr.mxu0 0.0
    %536 = vmatpush2.msra.mxu0 0.0
    %537 = vmatprep.subr.mxu0 0.0
    %538 = vmatpush2.msra.mxu0 0.0
    %539 = vmatprep.subr.mxu0 0.0
    %540 = vmatpush2.msra.mxu0 0.0
    %541 = vmatprep.subr.mxu0 0.0
    %542 = vmatpush2.msra.mxu0 0.0
    %543 = vmatprep.subr.mxu0 0.0
    %544 = vmatpush2.msra.mxu0 0.0
    %545 = vmatprep.mubr.f32.mxu0 0.0
    %v546 = vand.u32 %v91, 4294901760
    %547 = vmatmul.mubr.f32.gmra.mxu0 %v546
    %v548 = vpop.f32.mrf.mxu0
    %v549 = vadd.f32 %v476, %v548
    %v550 = vpop.f32.mrf.mxu0
    %551 = vdwg.mxu0
    %v552 = vmax.f32 %v549, 0.0
    %v553 = vld [vmem:[#allocation6] sm:$0xff]
    %v554 = vld [vmem:[#allocation6 + $0x8] sm:$0xff]
    %v555 = vld [vmem:[#allocation6 + $0x10] sm:$0xff]
    %v556 = vld [vmem:[#allocation6 + $0x18] sm:$0xff]
    %v557 = vld [vmem:[%s4] sm:$0x1]
    %v559 = vlaneseq
    %v560 = vshrl.u32 %v559, 7
    %v561 = vsub.s32 0, %v560
    %v562 = vrot.slane %v557, %v561
    %vm564 = vcmask 261120
    %v566 = vsel %vm564, %v552, 0
    %568 = vmatprep.subr.mxu0 0.0
    %569 = vmatpush1.msra.mxu0 0.0
    %570 = vmatprep.subr.mxu0 0.0
    %571 = vmatpush1.msra.mxu0 0.0
    %572 = vmatprep.subr.mxu0 0.0
    %573 = vmatpush1.msra.mxu0 0.0
    %574 = vmatprep.subr.mxu0 0.0
    %575 = vmatpush1.msra.mxu0 0.0
    %576 = vmatprep.subr.mxu0 0.0
    %577 = vmatpush1.msra.mxu0 0.0
    %578 = vmatprep.subr.mxu0 0.0
    %579 = vmatpush1.msra.mxu0 0.0
    %580 = vmatprep.subr.mxu0 0.0
    %581 = vmatpush1.msra.mxu0 0.0
    %582 = vmatprep.subr.mxu0 0.0
    %583 = vmatpush1.msra.mxu0 0.0
    %584 = vmatprep.subr.mxu0 0.0
    %585 = vmatpush1.msra.mxu0 0.0
    %586 = vmatprep.subr.mxu0 0.0
    %587 = vmatpush1.msra.mxu0 0.0
    %588 = vmatprep.subr.mxu0 0.0
    %589 = vmatpush1.msra.mxu0 0.0
    %590 = vmatprep.subr.mxu0 0.0
    %591 = vmatpush1.msra.mxu0 0.0
    %592 = vmatprep.subr.mxu0 0.0
    %v593 = vand.u32 %v556, 4294901760
    %594 = vmatpush1.msra.mxu0 %v593
    %595 = vmatprep.subr.mxu0 0.0
    %v596 = vand.u32 %v555, 4294901760
    %597 = vmatpush1.msra.mxu0 %v596
    %598 = vmatprep.subr.mxu0 0.0
    %v599 = vand.u32 %v554, 4294901760
    %600 = vmatpush1.msra.mxu0 %v599
    %601 = vmatprep.subr.mxu0 0.0
    %v602 = vand.u32 %v553, 4294901760
    %603 = vmatpush1.msra.mxu0 %v602
    %604 = vmatprep.subr.mxu0 0.0
    %605 = vmatpush2.msra.mxu0 0.0
    %606 = vmatprep.subr.mxu0 0.0
    %607 = vmatpush2.msra.mxu0 0.0
    %608 = vmatprep.subr.mxu0 0.0
    %609 = vmatpush2.msra.mxu0 0.0
    %610 = vmatprep.subr.mxu0 0.0
    %611 = vmatpush2.msra.mxu0 0.0
    %612 = vmatprep.subr.mxu0 0.0
    %613 = vmatpush2.msra.mxu0 0.0
    %614 = vmatprep.subr.mxu0 0.0
    %615 = vmatpush2.msra.mxu0 0.0
    %616 = vmatprep.subr.mxu0 0.0
    %617 = vmatpush2.msra.mxu0 0.0
    %618 = vmatprep.subr.mxu0 0.0
    %619 = vmatpush2.msra.mxu0 0.0
    %620 = vmatprep.subr.mxu0 0.0
    %621 = vmatpush2.msra.mxu0 0.0
    %622 = vmatprep.subr.mxu0 0.0
    %623 = vmatpush2.msra.mxu0 0.0
    %624 = vmatprep.subr.mxu0 0.0
    %625 = vmatpush2.msra.mxu0 0.0
    %626 = vmatprep.subr.mxu0 0.0
    %627 = vmatpush2.msra.mxu0 0.0
    %628 = vmatprep.subr.mxu0 0.0
    %629 = vmatpush2.msra.mxu0 0.0
    %630 = vmatprep.subr.mxu0 0.0
    %631 = vmatpush2.msra.mxu0 0.0
    %632 = vmatprep.subr.mxu0 0.0
    %633 = vmatpush2.msra.mxu0 0.0
    %634 = vmatprep.subr.mxu0 0.0
    %635 = vmatpush2.msra.mxu0 0.0
    %636 = vmatprep.mubr.f32.mxu0 0.0
    %v637 = vand.u32 %v566, 4294901760
    %v638 = vsub.f32 %v566, %v637
    %v639 = vand.u32 %v638, 4294901760
    %v640 = vsub.f32 %v638, %v639
    %v641 = vand.u32 %v640, 4294901760
    %642 = vmatmul.mubr.f32.gmra.mxu0 %v641
    %v643 = vpop.f32.mrf.mxu0
    %v644 = vadd.f32 %v562, %v643
    %v645 = vpop.f32.mrf.mxu0
    %646 = vdwg.mxu0
    %647 = vmatprep.subr.mxu0 0.0
    %648 = vmatpush1.msra.mxu0 0.0
    %649 = vmatprep.subr.mxu0 0.0
    %650 = vmatpush1.msra.mxu0 0.0
    %651 = vmatprep.subr.mxu0 0.0
    %652 = vmatpush1.msra.mxu0 0.0
    %653 = vmatprep.subr.mxu0 0.0
    %654 = vmatpush1.msra.mxu0 0.0
    %655 = vmatprep.subr.mxu0 0.0
    %656 = vmatpush1.msra.mxu0 0.0
    %657 = vmatprep.subr.mxu0 0.0
    %658 = vmatpush1.msra.mxu0 0.0
    %659 = vmatprep.subr.mxu0 0.0
    %660 = vmatpush1.msra.mxu0 0.0
    %661 = vmatprep.subr.mxu0 0.0
    %662 = vmatpush1.msra.mxu0 0.0
    %663 = vmatprep.subr.mxu0 0.0
    %664 = vmatpush1.msra.mxu0 0.0
    %665 = vmatprep.subr.mxu0 0.0
    %666 = vmatpush1.msra.mxu0 0.0
    %667 = vmatprep.subr.mxu0 0.0
    %668 = vmatpush1.msra.mxu0 0.0
    %669 = vmatprep.subr.mxu0 0.0
    %670 = vmatpush1.msra.mxu0 0.0
    %671 = vmatprep.subr.mxu0 0.0
    %v672 = vand.u32 %v556, 4294901760
    %v673 = vsub.f32 %v556, %v672
    %v674 = vand.u32 %v673, 4294901760
    %v675 = vsub.f32 %v673, %v674
    %v676 = vand.u32 %v675, 4294901760
    %677 = vmatpush1.msra.mxu0 %v676
    %678 = vmatprep.subr.mxu0 0.0
    %v679 = vand.u32 %v555, 4294901760
    %v680 = vsub.f32 %v555, %v679
    %v681 = vand.u32 %v680, 4294901760
    %v682 = vsub.f32 %v680, %v681
    %v683 = vand.u32 %v682, 4294901760
    %684 = vmatpush1.msra.mxu0 %v683
    %685 = vmatprep.subr.mxu0 0.0
    %v686 = vand.u32 %v554, 4294901760
    %v687 = vsub.f32 %v554, %v686
    %v688 = vand.u32 %v687, 4294901760
    %v689 = vsub.f32 %v687, %v688
    %v690 = vand.u32 %v689, 4294901760
    %691 = vmatpush1.msra.mxu0 %v690
    %692 = vmatprep.subr.mxu0 0.0
    %v693 = vand.u32 %v553, 4294901760
    %v694 = vsub.f32 %v553, %v693
    %v695 = vand.u32 %v694, 4294901760
    %v696 = vsub.f32 %v694, %v695
    %v697 = vand.u32 %v696, 4294901760
    %698 = vmatpush1.msra.mxu0 %v697
    %699 = vmatprep.subr.mxu0 0.0
    %700 = vmatpush2.msra.mxu0 0.0
    %701 = vmatprep.subr.mxu0 0.0
    %702 = vmatpush2.msra.mxu0 0.0
    %703 = vmatprep.subr.mxu0 0.0
    %704 = vmatpush2.msra.mxu0 0.0
    %705 = vmatprep.subr.mxu0 0.0
    %706 = vmatpush2.msra.mxu0 0.0
    %707 = vmatprep.subr.mxu0 0.0
    %708 = vmatpush2.msra.mxu0 0.0
    %709 = vmatprep.subr.mxu0 0.0
    %710 = vmatpush2.msra.mxu0 0.0
    %711 = vmatprep.subr.mxu0 0.0
    %712 = vmatpush2.msra.mxu0 0.0
    %713 = vmatprep.subr.mxu0 0.0
    %714 = vmatpush2.msra.mxu0 0.0
    %715 = vmatprep.subr.mxu0 0.0
    %716 = vmatpush2.msra.mxu0 0.0
    %717 = vmatprep.subr.mxu0 0.0
    %718 = vmatpush2.msra.mxu0 0.0
    %719 = vmatprep.subr.mxu0 0.0
    %720 = vmatpush2.msra.mxu0 0.0
    %721 = vmatprep.subr.mxu0 0.0
    %722 = vmatpush2.msra.mxu0 0.0
    %723 = vmatprep.subr.mxu0 0.0
    %724 = vmatpush2.msra.mxu0 0.0
    %725 = vmatprep.subr.mxu0 0.0
    %726 = vmatpush2.msra.mxu0 0.0
    %727 = vmatprep.subr.mxu0 0.0
    %728 = vmatpush2.msra.mxu0 0.0
    %729 = vmatprep.subr.mxu0 0.0
    %730 = vmatpush2.msra.mxu0 0.0
    %731 = vmatprep.mubr.f32.mxu0 0.0
    %v732 = vand.u32 %v566, 4294901760
    %733 = vmatmul.mubr.f32.gmra.mxu0 %v732
    %v734 = vpop.f32.mrf.mxu0
    %v735 = vadd.f32 %v644, %v734
    %v736 = vpop.f32.mrf.mxu0
    %737 = vdwg.mxu0
    %738 = vmatprep.subr.mxu0 0.0
    %739 = vmatpush1.msra.mxu0 0.0
    %740 = vmatprep.subr.mxu0 0.0
    %741 = vmatpush1.msra.mxu0 0.0
    %742 = vmatprep.subr.mxu0 0.0
    %743 = vmatpush1.msra.mxu0 0.0
    %744 = vmatprep.subr.mxu0 0.0
    %745 = vmatpush1.msra.mxu0 0.0
    %746 = vmatprep.subr.mxu0 0.0
    %747 = vmatpush1.msra.mxu0 0.0
    %748 = vmatprep.subr.mxu0 0.0
    %749 = vmatpush1.msra.mxu0 0.0
    %750 = vmatprep.subr.mxu0 0.0
    %751 = vmatpush1.msra.mxu0 0.0
    %752 = vmatprep.subr.mxu0 0.0
    %753 = vmatpush1.msra.mxu0 0.0
    %754 = vmatprep.subr.mxu0 0.0
    %755 = vmatpush1.msra.mxu0 0.0
    %756 = vmatprep.subr.mxu0 0.0
    %757 = vmatpush1.msra.mxu0 0.0
    %758 = vmatprep.subr.mxu0 0.0
    %759 = vmatpush1.msra.mxu0 0.0
    %760 = vmatprep.subr.mxu0 0.0
    %761 = vmatpush1.msra.mxu0 0.0
    %762 = vmatprep.subr.mxu0 0.0
    %v763 = vand.u32 %v556, 4294901760
    %v764 = vsub.f32 %v556, %v763
    %765 = vmatpush1.msra.mxu0 %v764
    %766 = vmatprep.subr.mxu0 0.0
    %v767 = vand.u32 %v555, 4294901760
    %v768 = vsub.f32 %v555, %v767
    %769 = vmatpush1.msra.mxu0 %v768
    %770 = vmatprep.subr.mxu0 0.0
    %v771 = vand.u32 %v554, 4294901760
    %v772 = vsub.f32 %v554, %v771
    %773 = vmatpush1.msra.mxu0 %v772
    %774 = vmatprep.subr.mxu0 0.0
    %v775 = vand.u32 %v553, 4294901760
    %v776 = vsub.f32 %v553, %v775
    %777 = vmatpush1.msra.mxu0 %v776
    %778 = vmatprep.subr.mxu0 0.0
    %779 = vmatpush2.msra.mxu0 0.0
    %780 = vmatprep.subr.mxu0 0.0
    %781 = vmatpush2.msra.mxu0 0.0
    %782 = vmatprep.subr.mxu0 0.0
    %783 = vmatpush2.msra.mxu0 0.0
    %784 = vmatprep.subr.mxu0 0.0
    %785 = vmatpush2.msra.mxu0 0.0
    %786 = vmatprep.subr.mxu0 0.0
    %787 = vmatpush2.msra.mxu0 0.0
    %788 = vmatprep.subr.mxu0 0.0
    %789 = vmatpush2.msra.mxu0 0.0
    %790 = vmatprep.subr.mxu0 0.0
    %791 = vmatpush2.msra.mxu0 0.0
    %792 = vmatprep.subr.mxu0 0.0
    %793 = vmatpush2.msra.mxu0 0.0
    %794 = vmatprep.subr.mxu0 0.0
    %795 = vmatpush2.msra.mxu0 0.0
    %796 = vmatprep.subr.mxu0 0.0
    %797 = vmatpush2.msra.mxu0 0.0
    %798 = vmatprep.subr.mxu0 0.0
    %799 = vmatpush2.msra.mxu0 0.0
    %800 = vmatprep.subr.mxu0 0.0
    %801 = vmatpush2.msra.mxu0 0.0
    %802 = vmatprep.subr.mxu0 0.0
    %803 = vmatpush2.msra.mxu0 0.0
    %804 = vmatprep.subr.mxu0 0.0
    %805 = vmatpush2.msra.mxu0 0.0
    %806 = vmatprep.subr.mxu0 0.0
    %807 = vmatpush2.msra.mxu0 0.0
    %808 = vmatprep.subr.mxu0 0.0
    %809 = vmatpush2.msra.mxu0 0.0
    %810 = vmatprep.mubr.f32.mxu0 0.0
    %v811 = vand.u32 %v566, 4294901760
    %v812 = vsub.f32 %v566, %v811
    %813 = vmatmul.mubr.f32.gmra.mxu0 %v812
    %v814 = vpop.f32.mrf.mxu0
    %v815 = vadd.f32 %v735, %v814
    %v816 = vpop.f32.mrf.mxu0
    %817 = vdwg.mxu0
    %818 = vmatprep.subr.mxu0 0.0
    %819 = vmatpush1.msra.mxu0 0.0
    %820 = vmatprep.subr.mxu0 0.0
    %821 = vmatpush1.msra.mxu0 0.0
    %822 = vmatprep.subr.mxu0 0.0
    %823 = vmatpush1.msra.mxu0 0.0
    %824 = vmatprep.subr.mxu0 0.0
    %825 = vmatpush1.msra.mxu0 0.0
    %826 = vmatprep.subr.mxu0 0.0
    %827 = vmatpush1.msra.mxu0 0.0
    %828 = vmatprep.subr.mxu0 0.0
    %829 = vmatpush1.msra.mxu0 0.0
    %830 = vmatprep.subr.mxu0 0.0
    %831 = vmatpush1.msra.mxu0 0.0
    %832 = vmatprep.subr.mxu0 0.0
    %833 = vmatpush1.msra.mxu0 0.0
    %834 = vmatprep.subr.mxu0 0.0
    %835 = vmatpush1.msra.mxu0 0.0
    %836 = vmatprep.subr.mxu0 0.0
    %837 = vmatpush1.msra.mxu0 0.0
    %838 = vmatprep.subr.mxu0 0.0
    %839 = vmatpush1.msra.mxu0 0.0
    %840 = vmatprep.subr.mxu0 0.0
    %841 = vmatpush1.msra.mxu0 0.0
    %842 = vmatprep.subr.mxu0 0.0
    %v843 = vand.u32 %v556, 4294901760
    %844 = vmatpush1.msra.mxu0 %v843
    %845 = vmatprep.subr.mxu0 0.0
    %v846 = vand.u32 %v555, 4294901760
    %847 = vmatpush1.msra.mxu0 %v846
    %848 = vmatprep.subr.mxu0 0.0
    %v849 = vand.u32 %v554, 4294901760
    %850 = vmatpush1.msra.mxu0 %v849
    %851 = vmatprep.subr.mxu0 0.0
    %v852 = vand.u32 %v553, 4294901760
    %853 = vmatpush1.msra.mxu0 %v852
    %854 = vmatprep.subr.mxu0 0.0
    %855 = vmatpush2.msra.mxu0 0.0
    %856 = vmatprep.subr.mxu0 0.0
    %857 = vmatpush2.msra.mxu0 0.0
    %858 = vmatprep.subr.mxu0 0.0
    %859 = vmatpush2.msra.mxu0 0.0
    %860 = vmatprep.subr.mxu0 0.0
    %861 = vmatpush2.msra.mxu0 0.0
    %862 = vmatprep.subr.mxu0 0.0
    %863 = vmatpush2.msra.mxu0 0.0
    %864 = vmatprep.subr.mxu0 0.0
    %865 = vmatpush2.msra.mxu0 0.0
    %866 = vmatprep.subr.mxu0 0.0
    %867 = vmatpush2.msra.mxu0 0.0
    %868 = vmatprep.subr.mxu0 0.0
    %869 = vmatpush2.msra.mxu0 0.0
    %870 = vmatprep.subr.mxu0 0.0
    %871 = vmatpush2.msra.mxu0 0.0
    %872 = vmatprep.subr.mxu0 0.0
    %873 = vmatpush2.msra.mxu0 0.0
    %874 = vmatprep.subr.mxu0 0.0
    %875 = vmatpush2.msra.mxu0 0.0
    %876 = vmatprep.subr.mxu0 0.0
    %877 = vmatpush2.msra.mxu0 0.0
    %878 = vmatprep.subr.mxu0 0.0
    %879 = vmatpush2.msra.mxu0 0.0
    %880 = vmatprep.subr.mxu0 0.0
    %881 = vmatpush2.msra.mxu0 0.0
    %882 = vmatprep.subr.mxu0 0.0
    %883 = vmatpush2.msra.mxu0 0.0
    %884 = vmatprep.subr.mxu0 0.0
    %885 = vmatpush2.msra.mxu0 0.0
    %886 = vmatprep.mubr.f32.mxu0 0.0
    %v887 = vand.u32 %v566, 4294901760
    %v888 = vsub.f32 %v566, %v887
    %v889 = vand.u32 %v888, 4294901760
    %890 = vmatmul.mubr.f32.gmra.mxu0 %v889
    %v891 = vpop.f32.mrf.mxu0
    %v892 = vadd.f32 %v815, %v891
    %v893 = vpop.f32.mrf.mxu0
    %894 = vdwg.mxu0
    %895 = vmatprep.subr.mxu0 0.0
    %896 = vmatpush1.msra.mxu0 0.0
    %897 = vmatprep.subr.mxu0 0.0
    %898 = vmatpush1.msra.mxu0 0.0
    %899 = vmatprep.subr.mxu0 0.0
    %900 = vmatpush1.msra.mxu0 0.0
    %901 = vmatprep.subr.mxu0 0.0
    %902 = vmatpush1.msra.mxu0 0.0
    %903 = vmatprep.subr.mxu0 0.0
    %904 = vmatpush1.msra.mxu0 0.0
    %905 = vmatprep.subr.mxu0 0.0
    %906 = vmatpush1.msra.mxu0 0.0
    %907 = vmatprep.subr.mxu0 0.0
    %908 = vmatpush1.msra.mxu0 0.0
    %909 = vmatprep.subr.mxu0 0.0
    %910 = vmatpush1.msra.mxu0 0.0
    %911 = vmatprep.subr.mxu0 0.0
    %912 = vmatpush1.msra.mxu0 0.0
    %913 = vmatprep.subr.mxu0 0.0
    %914 = vmatpush1.msra.mxu0 0.0
    %915 = vmatprep.subr.mxu0 0.0
    %916 = vmatpush1.msra.mxu0 0.0
    %917 = vmatprep.subr.mxu0 0.0
    %918 = vmatpush1.msra.mxu0 0.0
    %919 = vmatprep.subr.mxu0 0.0
    %v920 = vand.u32 %v556, 4294901760
    %v921 = vsub.f32 %v556, %v920
    %v922 = vand.u32 %v921, 4294901760
    %923 = vmatpush1.msra.mxu0 %v922
    %924 = vmatprep.subr.mxu0 0.0
    %v925 = vand.u32 %v555, 4294901760
    %v926 = vsub.f32 %v555, %v925
    %v927 = vand.u32 %v926, 4294901760
    %928 = vmatpush1.msra.mxu0 %v927
    %929 = vmatprep.subr.mxu0 0.0
    %v930 = vand.u32 %v554, 4294901760
    %v931 = vsub.f32 %v554, %v930
    %v932 = vand.u32 %v931, 4294901760
    %933 = vmatpush1.msra.mxu0 %v932
    %934 = vmatprep.subr.mxu0 0.0
    %v935 = vand.u32 %v553, 4294901760
    %v936 = vsub.f32 %v553, %v935
    %v937 = vand.u32 %v936, 4294901760
    %938 = vmatpush1.msra.mxu0 %v937
    %939 = vmatprep.subr.mxu0 0.0
    %940 = vmatpush2.msra.mxu0 0.0
    %941 = vmatprep.subr.mxu0 0.0
    %942 = vmatpush2.msra.mxu0 0.0
    %943 = vmatprep.subr.mxu0 0.0
    %944 = vmatpush2.msra.mxu0 0.0
    %945 = vmatprep.subr.mxu0 0.0
    %946 = vmatpush2.msra.mxu0 0.0
    %947 = vmatprep.subr.mxu0 0.0
    %948 = vmatpush2.msra.mxu0 0.0
    %949 = vmatprep.subr.mxu0 0.0
    %950 = vmatpush2.msra.mxu0 0.0
    %951 = vmatprep.subr.mxu0 0.0
    %952 = vmatpush2.msra.mxu0 0.0
    %953 = vmatprep.subr.mxu0 0.0
    %954 = vmatpush2.msra.mxu0 0.0
    %955 = vmatprep.subr.mxu0 0.0
    %956 = vmatpush2.msra.mxu0 0.0
    %957 = vmatprep.subr.mxu0 0.0
    %958 = vmatpush2.msra.mxu0 0.0
    %959 = vmatprep.subr.mxu0 0.0
    %960 = vmatpush2.msra.mxu0 0.0
    %961 = vmatprep.subr.mxu0 0.0
    %962 = vmatpush2.msra.mxu0 0.0
    %963 = vmatprep.subr.mxu0 0.0
    %964 = vmatpush2.msra.mxu0 0.0
    %965 = vmatprep.subr.mxu0 0.0
    %966 = vmatpush2.msra.mxu0 0.0
    %967 = vmatprep.subr.mxu0 0.0
    %968 = vmatpush2.msra.mxu0 0.0
    %969 = vmatprep.subr.mxu0 0.0
    %970 = vmatpush2.msra.mxu0 0.0
    %971 = vmatprep.mubr.f32.mxu0 0.0
    %v972 = vand.u32 %v566, 4294901760
    %973 = vmatmul.mubr.f32.gmra.mxu0 %v972
    %v974 = vpop.f32.mrf.mxu0
    %v975 = vadd.f32 %v892, %v974
    %v976 = vpop.f32.mrf.mxu0
    %977 = vdwg.mxu0
    %978 = vmatprep.subr.mxu0 0.0
    %979 = vmatpush1.msra.mxu0 0.0
    %980 = vmatprep.subr.mxu0 0.0
    %981 = vmatpush1.msra.mxu0 0.0
    %982 = vmatprep.subr.mxu0 0.0
    %983 = vmatpush1.msra.mxu0 0.0
    %984 = vmatprep.subr.mxu0 0.0
    %985 = vmatpush1.msra.mxu0 0.0
    %986 = vmatprep.subr.mxu0 0.0
    %987 = vmatpush1.msra.mxu0 0.0
    %988 = vmatprep.subr.mxu0 0.0
    %989 = vmatpush1.msra.mxu0 0.0
    %990 = vmatprep.subr.mxu0 0.0
    %991 = vmatpush1.msra.mxu0 0.0
    %992 = vmatprep.subr.mxu0 0.0
    %993 = vmatpush1.msra.mxu0 0.0
    %994 = vmatprep.subr.mxu0 0.0
    %995 = vmatpush1.msra.mxu0 0.0
    %996 = vmatprep.subr.mxu0 0.0
    %997 = vmatpush1.msra.mxu0 0.0
    %998 = vmatprep.subr.mxu0 0.0
    %999 = vmatpush1.msra.mxu0 0.0
    %1000 = vmatprep.subr.mxu0 0.0
    %1001 = vmatpush1.msra.mxu0 0.0
    %1002 = vmatprep.subr.mxu0 0.0
    %v1003 = vand.u32 %v556, 4294901760
    %1004 = vmatpush1.msra.mxu0 %v1003
    %1005 = vmatprep.subr.mxu0 0.0
    %v1006 = vand.u32 %v555, 4294901760
    %1007 = vmatpush1.msra.mxu0 %v1006
    %1008 = vmatprep.subr.mxu0 0.0
    %v1009 = vand.u32 %v554, 4294901760
    %1010 = vmatpush1.msra.mxu0 %v1009
    %1011 = vmatprep.subr.mxu0 0.0
    %v1012 = vand.u32 %v553, 4294901760
    %1013 = vmatpush1.msra.mxu0 %v1012
    %1014 = vmatprep.subr.mxu0 0.0
    %1015 = vmatpush2.msra.mxu0 0.0
    %1016 = vmatprep.subr.mxu0 0.0
    %1017 = vmatpush2.msra.mxu0 0.0
    %1018 = vmatprep.subr.mxu0 0.0
    %1019 = vmatpush2.msra.mxu0 0.0
    %1020 = vmatprep.subr.mxu0 0.0
    %1021 = vmatpush2.msra.mxu0 0.0
    %1022 = vmatprep.subr.mxu0 0.0
    %1023 = vmatpush2.msra.mxu0 0.0
    %1024 = vmatprep.subr.mxu0 0.0
    %1025 = vmatpush2.msra.mxu0 0.0
    %1026 = vmatprep.subr.mxu0 0.0
    %1027 = vmatpush2.msra.mxu0 0.0
    %1028 = vmatprep.subr.mxu0 0.0
    %1029 = vmatpush2.msra.mxu0 0.0
    %1030 = vmatprep.subr.mxu0 0.0
    %1031 = vmatpush2.msra.mxu0 0.0
    %1032 = vmatprep.subr.mxu0 0.0
    %1033 = vmatpush2.msra.mxu0 0.0
    %1034 = vmatprep.subr.mxu0 0.0
    %1035 = vmatpush2.msra.mxu0 0.0
    %1036 = vmatprep.subr.mxu0 0.0
    %1037 = vmatpush2.msra.mxu0 0.0
    %1038 = vmatprep.subr.mxu0 0.0
    %1039 = vmatpush2.msra.mxu0 0.0
    %1040 = vmatprep.subr.mxu0 0.0
    %1041 = vmatpush2.msra.mxu0 0.0
    %1042 = vmatprep.subr.mxu0 0.0
    %1043 = vmatpush2.msra.mxu0 0.0
    %1044 = vmatprep.subr.mxu0 0.0
    %1045 = vmatpush2.msra.mxu0 0.0
    %1046 = vmatprep.mubr.f32.mxu0 0.0
    %v1047 = vand.u32 %v566, 4294901760
    %1048 = vmatmul.mubr.f32.gmra.mxu0 %v1047
    %v1049 = vpop.f32.mrf.mxu0
    %v1050 = vadd.f32 %v975, %v1049
    %v1051 = vpop.f32.mrf.mxu0
    %1052 = vdwg.mxu0
    %v1053 = vmax.f32 %v1050, 0.0
    %v1054 = vld [vmem:[#allocation7] sm:$0xff]
    %v1055 = vld [vmem:[#allocation7 + $0x8] sm:$0xff]
    %v1056 = vld [vmem:[#allocation7 + $0x10] sm:$0xff]
    %v1057 = vld [vmem:[#allocation7 + $0x18] sm:$0xff]
    %v1058 = vld [vmem:[%s6] sm:$0x1]
    %v1060 = vlaneseq
    %v1061 = vshrl.u32 %v1060, 7
    %v1062 = vsub.s32 0, %v1061
    %v1063 = vrot.slane %v1058, %v1062
    %v1066 = vsel %vm564, %v1053, 0
    %1068 = vmatprep.subr.mxu0 0.0
    %1069 = vmatpush1.msra.mxu0 0.0
    %1070 = vmatprep.subr.mxu0 0.0
    %1071 = vmatpush1.msra.mxu0 0.0
    %1072 = vmatprep.subr.mxu0 0.0
    %1073 = vmatpush1.msra.mxu0 0.0
    %1074 = vmatprep.subr.mxu0 0.0
    %1075 = vmatpush1.msra.mxu0 0.0
    %1076 = vmatprep.subr.mxu0 0.0
    %1077 = vmatpush1.msra.mxu0 0.0
    %1078 = vmatprep.subr.mxu0 0.0
    %1079 = vmatpush1.msra.mxu0 0.0
    %1080 = vmatprep.subr.mxu0 0.0
    %1081 = vmatpush1.msra.mxu0 0.0
    %1082 = vmatprep.subr.mxu0 0.0
    %1083 = vmatpush1.msra.mxu0 0.0
    %1084 = vmatprep.subr.mxu0 0.0
    %1085 = vmatpush1.msra.mxu0 0.0
    %1086 = vmatprep.subr.mxu0 0.0
    %1087 = vmatpush1.msra.mxu0 0.0
    %1088 = vmatprep.subr.mxu0 0.0
    %1089 = vmatpush1.msra.mxu0 0.0
    %1090 = vmatprep.subr.mxu0 0.0
    %1091 = vmatpush1.msra.mxu0 0.0
    %1092 = vmatprep.subr.mxu0 0.0
    %v1093 = vand.u32 %v1057, 4294901760
    %1094 = vmatpush1.msra.mxu0 %v1093
    %1095 = vmatprep.subr.mxu0 0.0
    %v1096 = vand.u32 %v1056, 4294901760
    %1097 = vmatpush1.msra.mxu0 %v1096
    %1098 = vmatprep.subr.mxu0 0.0
    %v1099 = vand.u32 %v1055, 4294901760
    %1100 = vmatpush1.msra.mxu0 %v1099
    %1101 = vmatprep.subr.mxu0 0.0
    %v1102 = vand.u32 %v1054, 4294901760
    %1103 = vmatpush1.msra.mxu0 %v1102
    %1104 = vmatprep.subr.mxu0 0.0
    %1105 = vmatpush2.msra.mxu0 0.0
    %1106 = vmatprep.subr.mxu0 0.0
    %1107 = vmatpush2.msra.mxu0 0.0
    %1108 = vmatprep.subr.mxu0 0.0
    %1109 = vmatpush2.msra.mxu0 0.0
    %1110 = vmatprep.subr.mxu0 0.0
    %1111 = vmatpush2.msra.mxu0 0.0
    %1112 = vmatprep.subr.mxu0 0.0
    %1113 = vmatpush2.msra.mxu0 0.0
    %1114 = vmatprep.subr.mxu0 0.0
    %1115 = vmatpush2.msra.mxu0 0.0
    %1116 = vmatprep.subr.mxu0 0.0
    %1117 = vmatpush2.msra.mxu0 0.0
    %1118 = vmatprep.subr.mxu0 0.0
    %1119 = vmatpush2.msra.mxu0 0.0
    %1120 = vmatprep.subr.mxu0 0.0
    %1121 = vmatpush2.msra.mxu0 0.0
    %1122 = vmatprep.subr.mxu0 0.0
    %1123 = vmatpush2.msra.mxu0 0.0
    %1124 = vmatprep.subr.mxu0 0.0
    %1125 = vmatpush2.msra.mxu0 0.0
    %1126 = vmatprep.subr.mxu0 0.0
    %1127 = vmatpush2.msra.mxu0 0.0
    %1128 = vmatprep.subr.mxu0 0.0
    %1129 = vmatpush2.msra.mxu0 0.0
    %1130 = vmatprep.subr.mxu0 0.0
    %1131 = vmatpush2.msra.mxu0 0.0
    %1132 = vmatprep.subr.mxu0 0.0
    %1133 = vmatpush2.msra.mxu0 0.0
    %1134 = vmatprep.subr.mxu0 0.0
    %1135 = vmatpush2.msra.mxu0 0.0
    %1136 = vmatprep.mubr.f32.mxu0 0.0
    %v1137 = vand.u32 %v1066, 4294901760
    %v1138 = vsub.f32 %v1066, %v1137
    %v1139 = vand.u32 %v1138, 4294901760
    %v1140 = vsub.f32 %v1138, %v1139
    %v1141 = vand.u32 %v1140, 4294901760
    %1142 = vmatmul.mubr.f32.gmra.mxu0 %v1141
    %v1143 = vpop.f32.mrf.mxu0
    %v1144 = vadd.f32 %v1063, %v1143
    %v1145 = vpop.f32.mrf.mxu0
    %1146 = vdwg.mxu0
    %1147 = vmatprep.subr.mxu0 0.0
    %1148 = vmatpush1.msra.mxu0 0.0
    %1149 = vmatprep.subr.mxu0 0.0
    %1150 = vmatpush1.msra.mxu0 0.0
    %1151 = vmatprep.subr.mxu0 0.0
    %1152 = vmatpush1.msra.mxu0 0.0
    %1153 = vmatprep.subr.mxu0 0.0
    %1154 = vmatpush1.msra.mxu0 0.0
    %1155 = vmatprep.subr.mxu0 0.0
    %1156 = vmatpush1.msra.mxu0 0.0
    %1157 = vmatprep.subr.mxu0 0.0
    %1158 = vmatpush1.msra.mxu0 0.0
    %1159 = vmatprep.subr.mxu0 0.0
    %1160 = vmatpush1.msra.mxu0 0.0
    %1161 = vmatprep.subr.mxu0 0.0
    %1162 = vmatpush1.msra.mxu0 0.0
    %1163 = vmatprep.subr.mxu0 0.0
    %1164 = vmatpush1.msra.mxu0 0.0
    %1165 = vmatprep.subr.mxu0 0.0
    %1166 = vmatpush1.msra.mxu0 0.0
    %1167 = vmatprep.subr.mxu0 0.0
    %1168 = vmatpush1.msra.mxu0 0.0
    %1169 = vmatprep.subr.mxu0 0.0
    %1170 = vmatpush1.msra.mxu0 0.0
    %1171 = vmatprep.subr.mxu0 0.0
    %v1172 = vand.u32 %v1057, 4294901760
    %v1173 = vsub.f32 %v1057, %v1172
    %v1174 = vand.u32 %v1173, 4294901760
    %v1175 = vsub.f32 %v1173, %v1174
    %v1176 = vand.u32 %v1175, 4294901760
    %1177 = vmatpush1.msra.mxu0 %v1176
    %1178 = vmatprep.subr.mxu0 0.0
    %v1179 = vand.u32 %v1056, 4294901760
    %v1180 = vsub.f32 %v1056, %v1179
    %v1181 = vand.u32 %v1180, 4294901760
    %v1182 = vsub.f32 %v1180, %v1181
    %v1183 = vand.u32 %v1182, 4294901760
    %1184 = vmatpush1.msra.mxu0 %v1183
    %1185 = vmatprep.subr.mxu0 0.0
    %v1186 = vand.u32 %v1055, 4294901760
    %v1187 = vsub.f32 %v1055, %v1186
    %v1188 = vand.u32 %v1187, 4294901760
    %v1189 = vsub.f32 %v1187, %v1188
    %v1190 = vand.u32 %v1189, 4294901760
    %1191 = vmatpush1.msra.mxu0 %v1190
    %1192 = vmatprep.subr.mxu0 0.0
    %v1193 = vand.u32 %v1054, 4294901760
    %v1194 = vsub.f32 %v1054, %v1193
    %v1195 = vand.u32 %v1194, 4294901760
    %v1196 = vsub.f32 %v1194, %v1195
    %v1197 = vand.u32 %v1196, 4294901760
    %1198 = vmatpush1.msra.mxu0 %v1197
    %1199 = vmatprep.subr.mxu0 0.0
    %1200 = vmatpush2.msra.mxu0 0.0
    %1201 = vmatprep.subr.mxu0 0.0
    %1202 = vmatpush2.msra.mxu0 0.0
    %1203 = vmatprep.subr.mxu0 0.0
    %1204 = vmatpush2.msra.mxu0 0.0
    %1205 = vmatprep.subr.mxu0 0.0
    %1206 = vmatpush2.msra.mxu0 0.0
    %1207 = vmatprep.subr.mxu0 0.0
    %1208 = vmatpush2.msra.mxu0 0.0
    %1209 = vmatprep.subr.mxu0 0.0
    %1210 = vmatpush2.msra.mxu0 0.0
    %1211 = vmatprep.subr.mxu0 0.0
    %1212 = vmatpush2.msra.mxu0 0.0
    %1213 = vmatprep.subr.mxu0 0.0
    %1214 = vmatpush2.msra.mxu0 0.0
    %1215 = vmatprep.subr.mxu0 0.0
    %1216 = vmatpush2.msra.mxu0 0.0
    %1217 = vmatprep.subr.mxu0 0.0
    %1218 = vmatpush2.msra.mxu0 0.0
    %1219 = vmatprep.subr.mxu0 0.0
    %1220 = vmatpush2.msra.mxu0 0.0
    %1221 = vmatprep.subr.mxu0 0.0
    %1222 = vmatpush2.msra.mxu0 0.0
    %1223 = vmatprep.subr.mxu0 0.0
    %1224 = vmatpush2.msra.mxu0 0.0
    %1225 = vmatprep.subr.mxu0 0.0
    %1226 = vmatpush2.msra.mxu0 0.0
    %1227 = vmatprep.subr.mxu0 0.0
    %1228 = vmatpush2.msra.mxu0 0.0
    %1229 = vmatprep.subr.mxu0 0.0
    %1230 = vmatpush2.msra.mxu0 0.0
    %1231 = vmatprep.mubr.f32.mxu0 0.0
    %v1232 = vand.u32 %v1066, 4294901760
    %1233 = vmatmul.mubr.f32.gmra.mxu0 %v1232
    %v1234 = vpop.f32.mrf.mxu0
    %v1235 = vadd.f32 %v1144, %v1234
    %v1236 = vpop.f32.mrf.mxu0
    %1237 = vdwg.mxu0
    %1238 = vmatprep.subr.mxu0 0.0
    %1239 = vmatpush1.msra.mxu0 0.0
    %1240 = vmatprep.subr.mxu0 0.0
    %1241 = vmatpush1.msra.mxu0 0.0
    %1242 = vmatprep.subr.mxu0 0.0
    %1243 = vmatpush1.msra.mxu0 0.0
    %1244 = vmatprep.subr.mxu0 0.0
    %1245 = vmatpush1.msra.mxu0 0.0
    %1246 = vmatprep.subr.mxu0 0.0
    %1247 = vmatpush1.msra.mxu0 0.0
    %1248 = vmatprep.subr.mxu0 0.0
    %1249 = vmatpush1.msra.mxu0 0.0
    %1250 = vmatprep.subr.mxu0 0.0
    %1251 = vmatpush1.msra.mxu0 0.0
    %1252 = vmatprep.subr.mxu0 0.0
    %1253 = vmatpush1.msra.mxu0 0.0
    %1254 = vmatprep.subr.mxu0 0.0
    %1255 = vmatpush1.msra.mxu0 0.0
    %1256 = vmatprep.subr.mxu0 0.0
    %1257 = vmatpush1.msra.mxu0 0.0
    %1258 = vmatprep.subr.mxu0 0.0
    %1259 = vmatpush1.msra.mxu0 0.0
    %1260 = vmatprep.subr.mxu0 0.0
    %1261 = vmatpush1.msra.mxu0 0.0
    %1262 = vmatprep.subr.mxu0 0.0
    %v1263 = vand.u32 %v1057, 4294901760
    %v1264 = vsub.f32 %v1057, %v1263
    %1265 = vmatpush1.msra.mxu0 %v1264
    %1266 = vmatprep.subr.mxu0 0.0
    %v1267 = vand.u32 %v1056, 4294901760
    %v1268 = vsub.f32 %v1056, %v1267
    %1269 = vmatpush1.msra.mxu0 %v1268
    %1270 = vmatprep.subr.mxu0 0.0
    %v1271 = vand.u32 %v1055, 4294901760
    %v1272 = vsub.f32 %v1055, %v1271
    %1273 = vmatpush1.msra.mxu0 %v1272
    %1274 = vmatprep.subr.mxu0 0.0
    %v1275 = vand.u32 %v1054, 4294901760
    %v1276 = vsub.f32 %v1054, %v1275
    %1277 = vmatpush1.msra.mxu0 %v1276
    %1278 = vmatprep.subr.mxu0 0.0
    %1279 = vmatpush2.msra.mxu0 0.0
    %1280 = vmatprep.subr.mxu0 0.0
    %1281 = vmatpush2.msra.mxu0 0.0
    %1282 = vmatprep.subr.mxu0 0.0
    %1283 = vmatpush2.msra.mxu0 0.0
    %1284 = vmatprep.subr.mxu0 0.0
    %1285 = vmatpush2.msra.mxu0 0.0
    %1286 = vmatprep.subr.mxu0 0.0
    %1287 = vmatpush2.msra.mxu0 0.0
    %1288 = vmatprep.subr.mxu0 0.0
    %1289 = vmatpush2.msra.mxu0 0.0
    %1290 = vmatprep.subr.mxu0 0.0
    %1291 = vmatpush2.msra.mxu0 0.0
    %1292 = vmatprep.subr.mxu0 0.0
    %1293 = vmatpush2.msra.mxu0 0.0
    %1294 = vmatprep.subr.mxu0 0.0
    %1295 = vmatpush2.msra.mxu0 0.0
    %1296 = vmatprep.subr.mxu0 0.0
    %1297 = vmatpush2.msra.mxu0 0.0
    %1298 = vmatprep.subr.mxu0 0.0
    %1299 = vmatpush2.msra.mxu0 0.0
    %1300 = vmatprep.subr.mxu0 0.0
    %1301 = vmatpush2.msra.mxu0 0.0
    %1302 = vmatprep.subr.mxu0 0.0
    %1303 = vmatpush2.msra.mxu0 0.0
    %1304 = vmatprep.subr.mxu0 0.0
    %1305 = vmatpush2.msra.mxu0 0.0
    %1306 = vmatprep.subr.mxu0 0.0
    %1307 = vmatpush2.msra.mxu0 0.0
    %1308 = vmatprep.subr.mxu0 0.0
    %1309 = vmatpush2.msra.mxu0 0.0
    %1310 = vmatprep.mubr.f32.mxu0 0.0
    %v1311 = vand.u32 %v1066, 4294901760
    %v1312 = vsub.f32 %v1066, %v1311
    %1313 = vmatmul.mubr.f32.gmra.mxu0 %v1312
    %v1314 = vpop.f32.mrf.mxu0
    %v1315 = vadd.f32 %v1235, %v1314
    %v1316 = vpop.f32.mrf.mxu0
    %1317 = vdwg.mxu0
    %1318 = vmatprep.subr.mxu0 0.0
    %1319 = vmatpush1.msra.mxu0 0.0
    %1320 = vmatprep.subr.mxu0 0.0
    %1321 = vmatpush1.msra.mxu0 0.0
    %1322 = vmatprep.subr.mxu0 0.0
    %1323 = vmatpush1.msra.mxu0 0.0
    %1324 = vmatprep.subr.mxu0 0.0
    %1325 = vmatpush1.msra.mxu0 0.0
    %1326 = vmatprep.subr.mxu0 0.0
    %1327 = vmatpush1.msra.mxu0 0.0
    %1328 = vmatprep.subr.mxu0 0.0
    %1329 = vmatpush1.msra.mxu0 0.0
    %1330 = vmatprep.subr.mxu0 0.0
    %1331 = vmatpush1.msra.mxu0 0.0
    %1332 = vmatprep.subr.mxu0 0.0
    %1333 = vmatpush1.msra.mxu0 0.0
    %1334 = vmatprep.subr.mxu0 0.0
    %1335 = vmatpush1.msra.mxu0 0.0
    %1336 = vmatprep.subr.mxu0 0.0
    %1337 = vmatpush1.msra.mxu0 0.0
    %1338 = vmatprep.subr.mxu0 0.0
    %1339 = vmatpush1.msra.mxu0 0.0
    %1340 = vmatprep.subr.mxu0 0.0
    %1341 = vmatpush1.msra.mxu0 0.0
    %1342 = vmatprep.subr.mxu0 0.0
    %v1343 = vand.u32 %v1057, 4294901760
    %1344 = vmatpush1.msra.mxu0 %v1343
    %1345 = vmatprep.subr.mxu0 0.0
    %v1346 = vand.u32 %v1056, 4294901760
    %1347 = vmatpush1.msra.mxu0 %v1346
    %1348 = vmatprep.subr.mxu0 0.0
    %v1349 = vand.u32 %v1055, 4294901760
    %1350 = vmatpush1.msra.mxu0 %v1349
    %1351 = vmatprep.subr.mxu0 0.0
    %v1352 = vand.u32 %v1054, 4294901760
    %1353 = vmatpush1.msra.mxu0 %v1352
    %1354 = vmatprep.subr.mxu0 0.0
    %1355 = vmatpush2.msra.mxu0 0.0
    %1356 = vmatprep.subr.mxu0 0.0
    %1357 = vmatpush2.msra.mxu0 0.0
    %1358 = vmatprep.subr.mxu0 0.0
    %1359 = vmatpush2.msra.mxu0 0.0
    %1360 = vmatprep.subr.mxu0 0.0
    %1361 = vmatpush2.msra.mxu0 0.0
    %1362 = vmatprep.subr.mxu0 0.0
    %1363 = vmatpush2.msra.mxu0 0.0
    %1364 = vmatprep.subr.mxu0 0.0
    %1365 = vmatpush2.msra.mxu0 0.0
    %1366 = vmatprep.subr.mxu0 0.0
    %1367 = vmatpush2.msra.mxu0 0.0
    %1368 = vmatprep.subr.mxu0 0.0
    %1369 = vmatpush2.msra.mxu0 0.0
    %1370 = vmatprep.subr.mxu0 0.0
    %1371 = vmatpush2.msra.mxu0 0.0
    %1372 = vmatprep.subr.mxu0 0.0
    %1373 = vmatpush2.msra.mxu0 0.0
    %1374 = vmatprep.subr.mxu0 0.0
    %1375 = vmatpush2.msra.mxu0 0.0
    %1376 = vmatprep.subr.mxu0 0.0
    %1377 = vmatpush2.msra.mxu0 0.0
    %1378 = vmatprep.subr.mxu0 0.0
    %1379 = vmatpush2.msra.mxu0 0.0
    %1380 = vmatprep.subr.mxu0 0.0
    %1381 = vmatpush2.msra.mxu0 0.0
    %1382 = vmatprep.subr.mxu0 0.0
    %1383 = vmatpush2.msra.mxu0 0.0
    %1384 = vmatprep.subr.mxu0 0.0
    %1385 = vmatpush2.msra.mxu0 0.0
    %1386 = vmatprep.mubr.f32.mxu0 0.0
    %v1387 = vand.u32 %v1066, 4294901760
    %v1388 = vsub.f32 %v1066, %v1387
    %v1389 = vand.u32 %v1388, 4294901760
    %1390 = vmatmul.mubr.f32.gmra.mxu0 %v1389
    %v1391 = vpop.f32.mrf.mxu0
    %v1392 = vadd.f32 %v1315, %v1391
    %v1393 = vpop.f32.mrf.mxu0
    %1394 = vdwg.mxu0
    %1395 = vmatprep.subr.mxu0 0.0
    %1396 = vmatpush1.msra.mxu0 0.0
    %1397 = vmatprep.subr.mxu0 0.0
    %1398 = vmatpush1.msra.mxu0 0.0
    %1399 = vmatprep.subr.mxu0 0.0
    %1400 = vmatpush1.msra.mxu0 0.0
    %1401 = vmatprep.subr.mxu0 0.0
    %1402 = vmatpush1.msra.mxu0 0.0
    %1403 = vmatprep.subr.mxu0 0.0
    %1404 = vmatpush1.msra.mxu0 0.0
    %1405 = vmatprep.subr.mxu0 0.0
    %1406 = vmatpush1.msra.mxu0 0.0
    %1407 = vmatprep.subr.mxu0 0.0
    %1408 = vmatpush1.msra.mxu0 0.0
    %1409 = vmatprep.subr.mxu0 0.0
    %1410 = vmatpush1.msra.mxu0 0.0
    %1411 = vmatprep.subr.mxu0 0.0
    %1412 = vmatpush1.msra.mxu0 0.0
    %1413 = vmatprep.subr.mxu0 0.0
    %1414 = vmatpush1.msra.mxu0 0.0
    %1415 = vmatprep.subr.mxu0 0.0
    %1416 = vmatpush1.msra.mxu0 0.0
    %1417 = vmatprep.subr.mxu0 0.0
    %1418 = vmatpush1.msra.mxu0 0.0
    %1419 = vmatprep.subr.mxu0 0.0
    %v1420 = vand.u32 %v1057, 4294901760
    %v1421 = vsub.f32 %v1057, %v1420
    %v1422 = vand.u32 %v1421, 4294901760
    %1423 = vmatpush1.msra.mxu0 %v1422
    %1424 = vmatprep.subr.mxu0 0.0
    %v1425 = vand.u32 %v1056, 4294901760
    %v1426 = vsub.f32 %v1056, %v1425
    %v1427 = vand.u32 %v1426, 4294901760
    %1428 = vmatpush1.msra.mxu0 %v1427
    %1429 = vmatprep.subr.mxu0 0.0
    %v1430 = vand.u32 %v1055, 4294901760
    %v1431 = vsub.f32 %v1055, %v1430
    %v1432 = vand.u32 %v1431, 4294901760
    %1433 = vmatpush1.msra.mxu0 %v1432
    %1434 = vmatprep.subr.mxu0 0.0
    %v1435 = vand.u32 %v1054, 4294901760
    %v1436 = vsub.f32 %v1054, %v1435
    %v1437 = vand.u32 %v1436, 4294901760
    %1438 = vmatpush1.msra.mxu0 %v1437
    %1439 = vmatprep.subr.mxu0 0.0
    %1440 = vmatpush2.msra.mxu0 0.0
    %1441 = vmatprep.subr.mxu0 0.0
    %1442 = vmatpush2.msra.mxu0 0.0
    %1443 = vmatprep.subr.mxu0 0.0
    %1444 = vmatpush2.msra.mxu0 0.0
    %1445 = vmatprep.subr.mxu0 0.0
    %1446 = vmatpush2.msra.mxu0 0.0
    %1447 = vmatprep.subr.mxu0 0.0
    %1448 = vmatpush2.msra.mxu0 0.0
    %1449 = vmatprep.subr.mxu0 0.0
    %1450 = vmatpush2.msra.mxu0 0.0
    %1451 = vmatprep.subr.mxu0 0.0
    %1452 = vmatpush2.msra.mxu0 0.0
    %1453 = vmatprep.subr.mxu0 0.0
    %1454 = vmatpush2.msra.mxu0 0.0
    %1455 = vmatprep.subr.mxu0 0.0
    %1456 = vmatpush2.msra.mxu0 0.0
    %1457 = vmatprep.subr.mxu0 0.0
    %1458 = vmatpush2.msra.mxu0 0.0
    %1459 = vmatprep.subr.mxu0 0.0
    %1460 = vmatpush2.msra.mxu0 0.0
    %1461 = vmatprep.subr.mxu0 0.0
    %1462 = vmatpush2.msra.mxu0 0.0
    %1463 = vmatprep.subr.mxu0 0.0
    %1464 = vmatpush2.msra.mxu0 0.0
    %1465 = vmatprep.subr.mxu0 0.0
    %1466 = vmatpush2.msra.mxu0 0.0
    %1467 = vmatprep.subr.mxu0 0.0
    %1468 = vmatpush2.msra.mxu0 0.0
    %1469 = vmatprep.subr.mxu0 0.0
    %1470 = vmatpush2.msra.mxu0 0.0
    %1471 = vmatprep.mubr.f32.mxu0 0.0
    %v1472 = vand.u32 %v1066, 4294901760
    %1473 = vmatmul.mubr.f32.gmra.mxu0 %v1472
    %v1474 = vpop.f32.mrf.mxu0
    %v1475 = vadd.f32 %v1392, %v1474
    %v1476 = vpop.f32.mrf.mxu0
    %1477 = vdwg.mxu0
    %1478 = vmatprep.subr.mxu0 0.0
    %1479 = vmatpush1.msra.mxu0 0.0
    %1480 = vmatprep.subr.mxu0 0.0
    %1481 = vmatpush1.msra.mxu0 0.0
    %1482 = vmatprep.subr.mxu0 0.0
    %1483 = vmatpush1.msra.mxu0 0.0
    %1484 = vmatprep.subr.mxu0 0.0
    %1485 = vmatpush1.msra.mxu0 0.0
    %1486 = vmatprep.subr.mxu0 0.0
    %1487 = vmatpush1.msra.mxu0 0.0
    %1488 = vmatprep.subr.mxu0 0.0
    %1489 = vmatpush1.msra.mxu0 0.0
    %1490 = vmatprep.subr.mxu0 0.0
    %1491 = vmatpush1.msra.mxu0 0.0
    %1492 = vmatprep.subr.mxu0 0.0
    %1493 = vmatpush1.msra.mxu0 0.0
    %1494 = vmatprep.subr.mxu0 0.0
    %1495 = vmatpush1.msra.mxu0 0.0
    %1496 = vmatprep.subr.mxu0 0.0
    %1497 = vmatpush1.msra.mxu0 0.0
    %1498 = vmatprep.subr.mxu0 0.0
    %1499 = vmatpush1.msra.mxu0 0.0
    %1500 = vmatprep.subr.mxu0 0.0
    %1501 = vmatpush1.msra.mxu0 0.0
    %1502 = vmatprep.subr.mxu0 0.0
    %v1503 = vand.u32 %v1057, 4294901760
    %1504 = vmatpush1.msra.mxu0 %v1503
    %1505 = vmatprep.subr.mxu0 0.0
    %v1506 = vand.u32 %v1056, 4294901760
    %1507 = vmatpush1.msra.mxu0 %v1506
    %1508 = vmatprep.subr.mxu0 0.0
    %v1509 = vand.u32 %v1055, 4294901760
    %1510 = vmatpush1.msra.mxu0 %v1509
    %1511 = vmatprep.subr.mxu0 0.0
    %v1512 = vand.u32 %v1054, 4294901760
    %1513 = vmatpush1.msra.mxu0 %v1512
    %1514 = vmatprep.subr.mxu0 0.0
    %1515 = vmatpush2.msra.mxu0 0.0
    %1516 = vmatprep.subr.mxu0 0.0
    %1517 = vmatpush2.msra.mxu0 0.0
    %1518 = vmatprep.subr.mxu0 0.0
    %1519 = vmatpush2.msra.mxu0 0.0
    %1520 = vmatprep.subr.mxu0 0.0
    %1521 = vmatpush2.msra.mxu0 0.0
    %1522 = vmatprep.subr.mxu0 0.0
    %1523 = vmatpush2.msra.mxu0 0.0
    %1524 = vmatprep.subr.mxu0 0.0
    %1525 = vmatpush2.msra.mxu0 0.0
    %1526 = vmatprep.subr.mxu0 0.0
    %1527 = vmatpush2.msra.mxu0 0.0
    %1528 = vmatprep.subr.mxu0 0.0
    %1529 = vmatpush2.msra.mxu0 0.0
    %1530 = vmatprep.subr.mxu0 0.0
    %1531 = vmatpush2.msra.mxu0 0.0
    %1532 = vmatprep.subr.mxu0 0.0
    %1533 = vmatpush2.msra.mxu0 0.0
    %1534 = vmatprep.subr.mxu0 0.0
    %1535 = vmatpush2.msra.mxu0 0.0
    %1536 = vmatprep.subr.mxu0 0.0
    %1537 = vmatpush2.msra.mxu0 0.0
    %1538 = vmatprep.subr.mxu0 0.0
    %1539 = vmatpush2.msra.mxu0 0.0
    %1540 = vmatprep.subr.mxu0 0.0
    %1541 = vmatpush2.msra.mxu0 0.0
    %1542 = vmatprep.subr.mxu0 0.0
    %1543 = vmatpush2.msra.mxu0 0.0
    %1544 = vmatprep.subr.mxu0 0.0
    %1545 = vmatpush2.msra.mxu0 0.0
    %1546 = vmatprep.mubr.f32.mxu0 0.0
    %v1547 = vand.u32 %v1066, 4294901760
    %1548 = vmatmul.mubr.f32.gmra.mxu0 %v1547
    %v1549 = vpop.f32.mrf.mxu0
    %v1550 = vadd.f32 %v1475, %v1549
    %v1551 = vpop.f32.mrf.mxu0
    %1552 = vdwg.mxu0
    %1553 = vst [vmem:[%s7] sm:$0xff] %v1550
    // Predicated region
    $region46: #{fused_projection.1} parent=1 // pred_check
      _
    $region47: #{fused_projection.1} parent=1 // pred_check_branch
      %1555 = sbr.rel (0) target = $region49
    $region48: #{fused_projection.1} parent=1 // pred_region
      _
    $region49: #{fused_projection.1} parent=1 // pred_fallthru
      _
    // Predicated region
    $region50: #{fused_projection.1} parent=1 // pred_check
      _
    $region51: #{fused_projection.1} parent=1 // pred_check_branch
      %1557 = sbr.rel (0) target = $region53
    $region52: #{fused_projection.1} parent=1 // pred_region
      _
    $region53: #{fused_projection.1} parent=1 // pred_fallthru
      _
    %1558 = vsyncpa [#allocation3], 1
    %1559 = vsyncpa [#allocation5], 1
    %1560 = vsyncpa [#allocation8], 1

</llo_original>
